<compile_context>
chip_gen: v7x
topology: tpu7x:2x2x1
jax: 0.10.0
libtpu: 0.0.40
codegen_flags: <defaults>
</compile_context>

<pallas_src>
import numpy as np

import jax
import jax.numpy as jnp
from jax.experimental import pallas as pl
from jax.experimental.pallas import tpu as pltpu


# ---------------------------------------------------------------------------
# Host-side parameter preparation
# ---------------------------------------------------------------------------

def _fold_bn(conv_bias, gamma, beta, mean, var, eps=1e-5):
    """Fold inference BatchNorm (+ conv bias) into per-channel (scale, bias)."""
    scale = gamma / jnp.sqrt(var + eps)
    bias = beta + (conv_bias - mean) * scale
    return scale, bias


def _banded_conv1_weights(w_oihw, W, W2):
    """Banded conv1 weights with nearest-2x COLUMN upsample + column zero-pad folded in.

    Returns (3, W2*cin, W*cout); row tap dh of the conv becomes one matmul:
      out[h, w*cout+co] += sum_{w2,ci} R[h+dh, w2*cin+ci] * Wb[dh][w2*cin+ci, w*cout+co]
    where R is the row-duplicated low-res input with a zero row halo.
    """
    wt = np.transpose(np.asarray(w_oihw, np.float32), (2, 3, 1, 0))  # (dh, dw, ci, co)
    cin, cout = wt.shape[2], wt.shape[3]
    mats = []
    for dh in range(3):
        m = np.zeros((W2 * cin, W * cout), np.float32)
        for dw in range(3):
            sel = np.zeros((W2, W), np.float32)
            for w in range(W):
                q = w + dw                       # column in the padded upsampled image
                if 1 <= q <= W:                  # q==0 / q==W+1 are the zero padding
                    sel[(q - 1) // 2, w] = 1.0   # nearest: upsampled col q-1 <- low-res (q-1)//2
            m += np.kron(sel, wt[dh, dw])
        mats.append(m)
    return jnp.asarray(np.stack(mats))


def _banded_conv_weights(w_oihw, W):
    """Banded weights for a full-resolution 3x3 conv (pad=1), column taps + column
    zero-pad folded in.  Returns (3, W*cin, W*cout)."""
    wt = np.transpose(np.asarray(w_oihw, np.float32), (2, 3, 1, 0))  # (dh, dw, ci, co)
    cin, cout = wt.shape[2], wt.shape[3]
    mats = []
    for dh in range(3):
        m = np.zeros((W * cin, W * cout), np.float32)
        for dw in range(3):
            sel = np.eye(W, W, k=1 - dw, dtype=np.float32)   # sel[w+dw-1, w] = 1
            m += np.kron(sel, wt[dh, dw])
        mats.append(m)
    return jnp.asarray(np.stack(mats))


# ---------------------------------------------------------------------------
# Fused decoder kernel
# ---------------------------------------------------------------------------

def _decoder_kernel(x_lo_ref, inj_ref, w1_ref, w2a_ref, w2b_ref,
                    s1_ref, b1_ref, s2_ref, b2_ref,
                    o_ref, r_ref, o1_ref, injp_ref):
    """One batch element per grid step.

      x_lo_ref : (1, H/2, (W/2)*cin)   low-res input, (w, c) flattened onto lanes
      inj_ref  : (1, H,   W*cinj)      injected skip tensor
      w1_ref   : (3, (W/2)*cin, W*cout)  banded conv1 weights (upsample+pad folded)
      w2a_ref  : (3, W*cout,  W*cout)    banded conv2 weights, out1 channels
      w2b_ref  : (3, W*cinj,  W*cout)    banded conv2 weights, injected channels
      s*/b*    : (1, W*cout)             folded BN scale/bias, tiled over W
      o_ref    : (1, H, W*cout)          lane-dense output
      r_ref    : (H+2, (W/2)*cin) scratch  row-upsampled, row-padded conv1 input
      o1_ref   : (H+2, W*cout)    scratch  out1 + zero row halo (never leaves VMEM)
      injp_ref : (H+2, W*cinj)    scratch  injected + zero row halo
    """
    h2 = x_lo_ref.shape[1]
    H = o_ref.shape[1]
    w2c = r_ref.shape[1]
    wco = o_ref.shape[2]
    wci = injp_ref.shape[1]
    f32 = jnp.float32

    # --- conv1 input: nearest 2x ROW duplication + zero row halo (all in VMEM) --
    x_lo = x_lo_ref[0]                                            # (H/2, (W/2)*cin)
    up_rows = jnp.broadcast_to(x_lo[:, None, :], (h2, 2, w2c)).reshape(H, w2c)
    r_ref[0:1, :] = jnp.zeros((1, w2c), f32)
    r_ref[H + 1:H + 2, :] = jnp.zeros((1, w2c), f32)
    r_ref[1:H + 1, :] = up_rows

    # --- injected: zero row halo copy (column pad is folded into w2b) ----------
    injp_ref[0:1, :] = jnp.zeros((1, wci), f32)
    injp_ref[H + 1:H + 2, :] = jnp.zeros((1, wci), f32)
    injp_ref[1:H + 1, :] = inj_ref[0]

    # --- conv1 + folded BN + ReLU: 3 row-tap matmuls (K=(W/2)*cin, N=W*cout) ----
    acc1 = jnp.zeros((H, wco), f32)
    for dh in range(3):
        acc1 = acc1 + jnp.dot(r_ref[dh:dh + H, :], w1_ref[dh],
                              preferred_element_type=f32)
    out1 = jnp.maximum(acc1 * s1_ref[0] + b1_ref[0], 0.0)

    # keep out1 on-chip; the channel concat becomes split-K below
    o1_ref[0:1, :] = jnp.zeros((1, wco), f32)
    o1_ref[H + 1:H + 2, :] = jnp.zeros((1, wco), f32)
    o1_ref[1:H + 1, :] = out1

    # --- conv2 + folded BN + ReLU: 6 row-tap matmuls split over [out1 | inj] ----
    acc2 = jnp.zeros((H, wco), f32)
    for dh in range(3):
        acc2 = acc2 + jnp.dot(o1_ref[dh:dh + H, :], w2a_ref[dh],
                              preferred_element_type=f32)
        acc2 = acc2 + jnp.dot(injp_ref[dh:dh + H, :], w2b_ref[dh],
                              preferred_element_type=f32)
    o_ref[0] = jnp.maximum(acc2 * s2_ref[0] + b2_ref[0], 0.0).astype(o_ref.dtype)


def decoder_forward(params, inputs_nchw, injected_nchw):
    """inputs: (N, cin, H/2, W/2), injected: (N, cinj, H, W) -> (N, cout, H, W)."""
    N, cin, H2, W2 = inputs_nchw.shape
    Nj, cinj, H, W = injected_nchw.shape
    assert Nj == N and H == 2 * H2 and W == 2 * W2
    p1, p2 = params["conv1"], params["conv2"]
    cout = p1["w"].shape[0]
    wco = W * cout

    # NCHW -> NHWC -> flatten (W, C) onto the lane axis (the reshape is free).
    x_lo = jnp.transpose(inputs_nchw, (0, 2, 3, 1)).reshape(N, H2, W2 * cin)
    inj = jnp.transpose(injected_nchw, (0, 2, 3, 1)).reshape(N, H, W * cinj)

    # Folded BN (+ conv bias), tiled to the (W*cout) lane layout.
    s1, b1 = _fold_bn(p1["b"], p1["gamma"], p1["beta"], p1["mean"], p1["var"])
    s2, b2 = _fold_bn(p2["b"], p2["gamma"], p2["beta"], p2["mean"], p2["var"])
    s1t, b1t = jnp.tile(s1, W)[None, :], jnp.tile(b1, W)[None, :]
    s2t, b2t = jnp.tile(s2, W)[None, :], jnp.tile(b2, W)[None, :]

    # Banded weights (column taps / column pad / column-upsample folded in).
    w1b = _banded_conv1_weights(p1["w"], W, W2)            # (3, W2*cin, W*cout)
    w2ab = _banded_conv_weights(p2["w"][:, :cout], W)      # (3, W*cout, W*cout)
    w2bb = _banded_conv_weights(p2["w"][:, cout:], W)      # (3, W*cinj, W*cout)

    out_flat = pl.pallas_call(
        _decoder_kernel,
        out_shape=jax.ShapeDtypeStruct((N, H, wco), jnp.float32),
        grid=(N,),
        in_specs=[
            pl.BlockSpec((1, H2, W2 * cin), lambda n: (n, 0, 0)),
            pl.BlockSpec((1, H, W * cinj), lambda n: (n, 0, 0)),
            # weights / scales: constant index -> resident in VMEM across steps
            pl.BlockSpec((3, W2 * cin, wco), lambda n: (0, 0, 0)),
            pl.BlockSpec((3, W * cout, wco), lambda n: (0, 0, 0)),
            pl.BlockSpec((3, W * cinj, wco), lambda n: (0, 0, 0)),
            pl.BlockSpec((1, wco), lambda n: (0, 0)),
            pl.BlockSpec((1, wco), lambda n: (0, 0)),
            pl.BlockSpec((1, wco), lambda n: (0, 0)),
            pl.BlockSpec((1, wco), lambda n: (0, 0)),
        ],
        out_specs=pl.BlockSpec((1, H, wco), lambda n: (n, 0, 0)),
        scratch_shapes=[
            pltpu.VMEM((H + 2, W2 * cin), jnp.float32),    # row-upsampled conv1 input
            pltpu.VMEM((H + 2, wco), jnp.float32),         # out1 (+ row halo)
            pltpu.VMEM((H + 2, W * cinj), jnp.float32),    # injected (+ row halo)
        ],
        compiler_params=pltpu.CompilerParams(
            dimension_semantics=("parallel",),   # batch shards across TCs (v7x megacore)
        ),
    )(x_lo, inj, w1b, w2ab, w2bb, s1t, b1t, s2t, b2t)

    # (N, H, W*cout) -> (N, H, W, cout) -> NCHW
    return jnp.transpose(out_flat.reshape(N, H, W, cout), (0, 3, 1, 2))


# ---------------------------------------------------------------------------
# Synthetic parameters + pure-JAX reference
# ---------------------------------------------------------------------------

def init_decoder_params(key, in_channels, injected_channels, out_channels):
    """Deterministic synthetic parameters (PyTorch conv weight layout OIHW)."""
    ks = jax.random.split(key, 12)

    def conv_bn(kw, kb, kg, kbe, km, kv, cin, cout):
        w = jax.random.normal(kw, (cout, cin, 3, 3), jnp.float32) * 0.1   # OIHW
        b = jax.random.normal(kb, (cout,), jnp.float32) * 0.1
        gamma = 1.0 + 0.1 * jax.random.normal(kg, (cout,), jnp.float32)
        beta = 0.1 * jax.random.normal(kbe, (cout,), jnp.float32)
        mean = 0.1 * jax.random.normal(km, (cout,), jnp.float32)
        var = 0.5 + jnp.abs(jax.random.normal(kv, (cout,), jnp.float32)) * 0.5
        return dict(w=w, b=b, gamma=gamma, beta=beta, mean=mean, var=var)

    p1 = conv_bn(*ks[0:6], in_channels, out_channels)
    p2 = conv_bn(*ks[6:12], out_channels + injected_channels, out_channels)
    return dict(conv1=p1, conv2=p2)


def _ref_forward(params, inputs_nchw, injected_nchw):
    """Pure-JAX reference (lax conv, NCHW) for correctness check."""
    def block(x, p):
        y = jax.lax.conv_general_dilated(
            x, p["w"], (1, 1), ((1, 1), (1, 1)),
            dimension_numbers=("NCHW", "OIHW", "NCHW"))
        y = y + p["b"][None, :, None, None]
        y = (p["gamma"][None, :, None, None]
             * (y - p["mean"][None, :, None, None])
             / jnp.sqrt(p["var"] + 1e-5)[None, :, None, None]
             + p["beta"][None, :, None, None])
        return jnp.maximum(y, 0.0)

    x = jnp.repeat(jnp.repeat(inputs_nchw, 2, axis=2), 2, axis=3)   # nearest 2x
    out1 = block(x, params["conv1"])
    cat = jnp.concatenate([out1, injected_nchw], axis=1)
    return block(cat, params["conv2"])


if __name__ == "__main__":
    N = 2
    in_channels, injected_channels, out_channels = 4, 6, 8
    H = 16  # output spatial size; `inputs` arrives at H/2

    key = jax.random.PRNGKey(0)
    k_in, k_inj, k_par = jax.random.split(key, 3)
    inputs = jax.random.normal(k_in, (N, in_channels, H // 2, H // 2), jnp.float32)
    injected = jax.random.normal(k_inj, (N, injected_channels, H, H), jnp.float32)
    params = init_decoder_params(k_par, in_channels, injected_channels, out_channels)

    out = jax.block_until_ready(decoder_forward(params, inputs, injected))
    assert out.shape == (N, out_channels, H, H), out.shape

    ref = jax.block_until_ready(_ref_forward(params, inputs, injected))
    assert jnp.allclose(out, ref, atol=1e-4, rtol=1e-4), float(jnp.max(jnp.abs(out - ref)))

    print("KERNEL_OK")
</pallas_src>

<mosaic_0001>
module attributes {stable_mosaic.version = 11 : i64} {
  func.func @_decoder_kernel(%arg0: i32, %arg1: memref<1x8x32xf32, #tpu.memory_space<vmem>>, %arg2: memref<1x16x96xf32, #tpu.memory_space<vmem>>, %arg3: memref<3x32x128xf32, #tpu.memory_space<vmem>>, %arg4: memref<3x128x128xf32, #tpu.memory_space<vmem>>, %arg5: memref<3x96x128xf32, #tpu.memory_space<vmem>>, %arg6: memref<1x128xf32, #tpu.memory_space<vmem>>, %arg7: memref<1x128xf32, #tpu.memory_space<vmem>>, %arg8: memref<1x128xf32, #tpu.memory_space<vmem>>, %arg9: memref<1x128xf32, #tpu.memory_space<vmem>>, %arg10: memref<1x16x128xf32, #tpu.memory_space<vmem>>, %arg11: memref<18x32xf32, #tpu.memory_space<vmem>>, %arg12: memref<18x128xf32, #tpu.memory_space<vmem>>, %arg13: memref<18x96xf32, #tpu.memory_space<vmem>>) attributes {dimension_semantics = [#tpu.dimension_semantics<parallel>], iteration_bounds = array<i64: 2>, scalar_prefetch = 0 : i64, scratch_operands = 3 : i64, tpu.core_type = #tpu.core_type<tc>, window_params = [{transform_indices = @transform_0, window_bounds = array<i64: 1, 8, 32>}, {transform_indices = @transform_1, window_bounds = array<i64: 1, 16, 96>}, {pipeline_mode = #tpu.pipeline_mode<synchronous>, transform_indices = @transform_2, window_bounds = array<i64: 3, 32, 128>}, {pipeline_mode = #tpu.pipeline_mode<synchronous>, transform_indices = @transform_3, window_bounds = array<i64: 3, 128, 128>}, {pipeline_mode = #tpu.pipeline_mode<synchronous>, transform_indices = @transform_4, window_bounds = array<i64: 3, 96, 128>}, {pipeline_mode = #tpu.pipeline_mode<synchronous>, transform_indices = @transform_5, window_bounds = array<i64: 1, 128>}, {pipeline_mode = #tpu.pipeline_mode<synchronous>, transform_indices = @transform_6, window_bounds = array<i64: 1, 128>}, {pipeline_mode = #tpu.pipeline_mode<synchronous>, transform_indices = @transform_7, window_bounds = array<i64: 1, 128>}, {pipeline_mode = #tpu.pipeline_mode<synchronous>, transform_indices = @transform_8, window_bounds = array<i64: 1, 128>}, {transform_indices = @transform_9, window_bounds = array<i64: 1, 16, 128>}]} {
    %c0 = arith.constant 0 : index
    %c0_0 = arith.constant 0 : index
    %c0_1 = arith.constant 0 : index
    %0 = vector.load %arg1[%c0, %c0_0, %c0_1] : memref<1x8x32xf32, #tpu.memory_space<vmem>>, vector<1x8x32xf32>
    %1 = vector.shape_cast %0 : vector<1x8x32xf32> to vector<8x32xf32>
    %2 = vector.shape_cast %1 : vector<8x32xf32> to vector<8x1x32xf32>
    %3 = vector.shape_cast %2 : vector<8x1x32xf32> to vector<8x1x32xf32>
    %4 = vector.broadcast %3 : vector<8x1x32xf32> to vector<8x2x32xf32>
    %5 = vector.shape_cast %4 : vector<8x2x32xf32> to vector<16x32xf32>
    %cst = arith.constant 0.000000e+00 : f32
    %6 = vector.broadcast %cst : f32 to vector<1x32xf32>
    %c0_2 = arith.constant 0 : index
    %c0_3 = arith.constant 0 : index
    %7 = vector.load %arg11[%c0_2, %c0_3] : memref<18x32xf32, #tpu.memory_space<vmem>>, vector<1x32xf32>
    tpu.vector_store %arg11[%c0_2, %c0_3], %6 {strides = array<i32>} : memref<18x32xf32, #tpu.memory_space<vmem>>, vector<1x32xf32>,
    %cst_4 = arith.constant 0.000000e+00 : f32
    %8 = vector.broadcast %cst_4 : f32 to vector<1x32xf32>
    %c17 = arith.constant 17 : index
    %c0_5 = arith.constant 0 : index
    %9 = vector.load %arg11[%c17, %c0_5] : memref<18x32xf32, #tpu.memory_space<vmem>>, vector<1x32xf32>
    tpu.vector_store %arg11[%c17, %c0_5], %8 {strides = array<i32>} : memref<18x32xf32, #tpu.memory_space<vmem>>, vector<1x32xf32>,
    %c1 = arith.constant 1 : index
    %c0_6 = arith.constant 0 : index
    %10 = vector.load %arg11[%c1, %c0_6] : memref<18x32xf32, #tpu.memory_space<vmem>>, vector<16x32xf32>
    tpu.vector_store %arg11[%c1, %c0_6], %5 {strides = array<i32>} : memref<18x32xf32, #tpu.memory_space<vmem>>, vector<16x32xf32>,
    %cst_7 = arith.constant 0.000000e+00 : f32
    %11 = vector.broadcast %cst_7 : f32 to vector<1x96xf32>
    %c0_8 = arith.constant 0 : index
    %c0_9 = arith.constant 0 : index
    %12 = vector.load %arg13[%c0_8, %c0_9] : memref<18x96xf32, #tpu.memory_space<vmem>>, vector<1x96xf32>
    tpu.vector_store %arg13[%c0_8, %c0_9], %11 {strides = array<i32>} : memref<18x96xf32, #tpu.memory_space<vmem>>, vector<1x96xf32>,
    %cst_10 = arith.constant 0.000000e+00 : f32
    %13 = vector.broadcast %cst_10 : f32 to vector<1x96xf32>
    %c17_11 = arith.constant 17 : index
    %c0_12 = arith.constant 0 : index
    %14 = vector.load %arg13[%c17_11, %c0_12] : memref<18x96xf32, #tpu.memory_space<vmem>>, vector<1x96xf32>
    tpu.vector_store %arg13[%c17_11, %c0_12], %13 {strides = array<i32>} : memref<18x96xf32, #tpu.memory_space<vmem>>, vector<1x96xf32>,
    %c0_13 = arith.constant 0 : index
    %c0_14 = arith.constant 0 : index
    %c0_15 = arith.constant 0 : index
    %15 = vector.load %arg2[%c0_13, %c0_14, %c0_15] : memref<1x16x96xf32, #tpu.memory_space<vmem>>, vector<1x16x96xf32>
    %16 = vector.shape_cast %15 : vector<1x16x96xf32> to vector<16x96xf32>
    %c1_16 = arith.constant 1 : index
    %c0_17 = arith.constant 0 : index
    %17 = vector.load %arg13[%c1_16, %c0_17] : memref<18x96xf32, #tpu.memory_space<vmem>>, vector<16x96xf32>
    tpu.vector_store %arg13[%c1_16, %c0_17], %16 {strides = array<i32>} : memref<18x96xf32, #tpu.memory_space<vmem>>, vector<16x96xf32>,
    %cst_18 = arith.constant 0.000000e+00 : f32
    %18 = vector.broadcast %cst_18 : f32 to vector<16x128xf32>
    %c0_19 = arith.constant 0 : index
    %c0_20 = arith.constant 0 : index
    %19 = vector.load %arg11[%c0_19, %c0_20] : memref<18x32xf32, #tpu.memory_space<vmem>>, vector<16x32xf32>
    %c0_21 = arith.constant 0 : index
    %c0_22 = arith.constant 0 : index
    %c0_23 = arith.constant 0 : index
    %20 = vector.load %arg3[%c0_21, %c0_22, %c0_23] : memref<3x32x128xf32, #tpu.memory_space<vmem>>, vector<1x32x128xf32>
    %21 = vector.shape_cast %20 : vector<1x32x128xf32> to vector<32x128xf32>
    %cst_24 = arith.constant dense<0.000000e+00> : vector<16x128xf32>
    %22 = tpu.matmul %19, %21, %cst_24 {dimension_numbers = #tpu.dot_dimension_numbers<[1], [0], [0], [1], [0, 0, 1, 1], [], []>} : vector<16x32xf32>, vector<32x128xf32>, vector<16x128xf32> -> vector<16x128xf32>
    %23 = arith.addf %18, %22 : vector<16x128xf32>
    %c1_25 = arith.constant 1 : index
    %c0_26 = arith.constant 0 : index
    %24 = vector.load %arg11[%c1_25, %c0_26] : memref<18x32xf32, #tpu.memory_space<vmem>>, vector<16x32xf32>
    %c1_27 = arith.constant 1 : index
    %c0_28 = arith.constant 0 : index
    %c0_29 = arith.constant 0 : index
    %25 = vector.load %arg3[%c1_27, %c0_28, %c0_29] : memref<3x32x128xf32, #tpu.memory_space<vmem>>, vector<1x32x128xf32>
    %26 = vector.shape_cast %25 : vector<1x32x128xf32> to vector<32x128xf32>
    %cst_30 = arith.constant dense<0.000000e+00> : vector<16x128xf32>
    %27 = tpu.matmul %24, %26, %cst_30 {dimension_numbers = #tpu.dot_dimension_numbers<[1], [0], [0], [1], [0, 0, 1, 1], [], []>} : vector<16x32xf32>, vector<32x128xf32>, vector<16x128xf32> -> vector<16x128xf32>
    %28 = arith.addf %23, %27 : vector<16x128xf32>
    %c2 = arith.constant 2 : index
    %c0_31 = arith.constant 0 : index
    %29 = vector.load %arg11[%c2, %c0_31] : memref<18x32xf32, #tpu.memory_space<vmem>>, vector<16x32xf32>
    %c2_32 = arith.constant 2 : index
    %c0_33 = arith.constant 0 : index
    %c0_34 = arith.constant 0 : index
    %30 = vector.load %arg3[%c2_32, %c0_33, %c0_34] : memref<3x32x128xf32, #tpu.memory_space<vmem>>, vector<1x32x128xf32>
    %31 = vector.shape_cast %30 : vector<1x32x128xf32> to vector<32x128xf32>
    %cst_35 = arith.constant dense<0.000000e+00> : vector<16x128xf32>
    %32 = tpu.matmul %29, %31, %cst_35 {dimension_numbers = #tpu.dot_dimension_numbers<[1], [0], [0], [1], [0, 0, 1, 1], [], []>} : vector<16x32xf32>, vector<32x128xf32>, vector<16x128xf32> -> vector<16x128xf32>
    %33 = arith.addf %28, %32 : vector<16x128xf32>
    %c0_36 = arith.constant 0 : index
    %c0_37 = arith.constant 0 : index
    %34 = vector.load %arg6[%c0_36, %c0_37] : memref<1x128xf32, #tpu.memory_space<vmem>>, vector<1x128xf32>
    %35 = vector.shape_cast %34 : vector<1x128xf32> to vector<128xf32>
    %36 = vector.shape_cast %35 : vector<128xf32> to vector<1x128xf32>
    %37 = vector.broadcast %36 : vector<1x128xf32> to vector<16x128xf32>
    %38 = arith.mulf %33, %37 : vector<16x128xf32>
    %c0_38 = arith.constant 0 : index
    %c0_39 = arith.constant 0 : index
    %39 = vector.load %arg7[%c0_38, %c0_39] : memref<1x128xf32, #tpu.memory_space<vmem>>, vector<1x128xf32>
    %40 = vector.shape_cast %39 : vector<1x128xf32> to vector<128xf32>
    %41 = vector.shape_cast %40 : vector<128xf32> to vector<1x128xf32>
    %42 = vector.broadcast %41 : vector<1x128xf32> to vector<16x128xf32>
    %43 = arith.addf %38, %42 : vector<16x128xf32>
    %cst_40 = arith.constant 0.000000e+00 : f32
    %44 = vector.broadcast %cst_40 : f32 to vector<16x128xf32>
    %45 = arith.maximumf %43, %44 : vector<16x128xf32>
    %cst_41 = arith.constant 0.000000e+00 : f32
    %46 = vector.broadcast %cst_41 : f32 to vector<1x128xf32>
    %c0_42 = arith.constant 0 : index
    %c0_43 = arith.constant 0 : index
    %47 = vector.load %arg12[%c0_42, %c0_43] : memref<18x128xf32, #tpu.memory_space<vmem>>, vector<1x128xf32>
    tpu.vector_store %arg12[%c0_42, %c0_43], %46 {strides = array<i32>} : memref<18x128xf32, #tpu.memory_space<vmem>>, vector<1x128xf32>,
    %cst_44 = arith.constant 0.000000e+00 : f32
    %48 = vector.broadcast %cst_44 : f32 to vector<1x128xf32>
    %c17_45 = arith.constant 17 : index
    %c0_46 = arith.constant 0 : index
    %49 = vector.load %arg12[%c17_45, %c0_46] : memref<18x128xf32, #tpu.memory_space<vmem>>, vector<1x128xf32>
    tpu.vector_store %arg12[%c17_45, %c0_46], %48 {strides = array<i32>} : memref<18x128xf32, #tpu.memory_space<vmem>>, vector<1x128xf32>,
    %c1_47 = arith.constant 1 : index
    %c0_48 = arith.constant 0 : index
    %50 = vector.load %arg12[%c1_47, %c0_48] : memref<18x128xf32, #tpu.memory_space<vmem>>, vector<16x128xf32>
    tpu.vector_store %arg12[%c1_47, %c0_48], %45 {strides = array<i32>} : memref<18x128xf32, #tpu.memory_space<vmem>>, vector<16x128xf32>,
    %cst_49 = arith.constant 0.000000e+00 : f32
    %51 = vector.broadcast %cst_49 : f32 to vector<16x128xf32>
    %c0_50 = arith.constant 0 : index
    %c0_51 = arith.constant 0 : index
    %52 = vector.load %arg12[%c0_50, %c0_51] : memref<18x128xf32, #tpu.memory_space<vmem>>, vector<16x128xf32>
    %c0_52 = arith.constant 0 : index
    %c0_53 = arith.constant 0 : index
    %c0_54 = arith.constant 0 : index
    %53 = vector.load %arg4[%c0_52, %c0_53, %c0_54] : memref<3x128x128xf32, #tpu.memory_space<vmem>>, vector<1x128x128xf32>
    %54 = vector.shape_cast %53 : vector<1x128x128xf32> to vector<128x128xf32>
    %cst_55 = arith.constant dense<0.000000e+00> : vector<16x128xf32>
    %55 = tpu.matmul %52, %54, %cst_55 {dimension_numbers = #tpu.dot_dimension_numbers<[1], [0], [0], [1], [0, 0, 1, 1], [], []>} : vector<16x128xf32>, vector<128x128xf32>, vector<16x128xf32> -> vector<16x128xf32>
    %56 = arith.addf %51, %55 : vector<16x128xf32>
    %c0_56 = arith.constant 0 : index
    %c0_57 = arith.constant 0 : index
    %57 = vector.load %arg13[%c0_56, %c0_57] : memref<18x96xf32, #tpu.memory_space<vmem>>, vector<16x96xf32>
    %c0_58 = arith.constant 0 : index
    %c0_59 = arith.constant 0 : index
    %c0_60 = arith.constant 0 : index
    %58 = vector.load %arg5[%c0_58, %c0_59, %c0_60] : memref<3x96x128xf32, #tpu.memory_space<vmem>>, vector<1x96x128xf32>
    %59 = vector.shape_cast %58 : vector<1x96x128xf32> to vector<96x128xf32>
    %cst_61 = arith.constant dense<0.000000e+00> : vector<16x128xf32>
    %60 = tpu.matmul %57, %59, %cst_61 {dimension_numbers = #tpu.dot_dimension_numbers<[1], [0], [0], [1], [0, 0, 1, 1], [], []>} : vector<16x96xf32>, vector<96x128xf32>, vector<16x128xf32> -> vector<16x128xf32>
    %61 = arith.addf %56, %60 : vector<16x128xf32>
    %c1_62 = arith.constant 1 : index
    %c0_63 = arith.constant 0 : index
    %62 = vector.load %arg12[%c1_62, %c0_63] : memref<18x128xf32, #tpu.memory_space<vmem>>, vector<16x128xf32>
    %c1_64 = arith.constant 1 : index
    %c0_65 = arith.constant 0 : index
    %c0_66 = arith.constant 0 : index
    %63 = vector.load %arg4[%c1_64, %c0_65, %c0_66] : memref<3x128x128xf32, #tpu.memory_space<vmem>>, vector<1x128x128xf32>
    %64 = vector.shape_cast %63 : vector<1x128x128xf32> to vector<128x128xf32>
    %cst_67 = arith.constant dense<0.000000e+00> : vector<16x128xf32>
    %65 = tpu.matmul %62, %64, %cst_67 {dimension_numbers = #tpu.dot_dimension_numbers<[1], [0], [0], [1], [0, 0, 1, 1], [], []>} : vector<16x128xf32>, vector<128x128xf32>, vector<16x128xf32> -> vector<16x128xf32>
    %66 = arith.addf %61, %65 : vector<16x128xf32>
    %c1_68 = arith.constant 1 : index
    %c0_69 = arith.constant 0 : index
    %67 = vector.load %arg13[%c1_68, %c0_69] : memref<18x96xf32, #tpu.memory_space<vmem>>, vector<16x96xf32>
    %c1_70 = arith.constant 1 : index
    %c0_71 = arith.constant 0 : index
    %c0_72 = arith.constant 0 : index
    %68 = vector.load %arg5[%c1_70, %c0_71, %c0_72] : memref<3x96x128xf32, #tpu.memory_space<vmem>>, vector<1x96x128xf32>
    %69 = vector.shape_cast %68 : vector<1x96x128xf32> to vector<96x128xf32>
    %cst_73 = arith.constant dense<0.000000e+00> : vector<16x128xf32>
    %70 = tpu.matmul %67, %69, %cst_73 {dimension_numbers = #tpu.dot_dimension_numbers<[1], [0], [0], [1], [0, 0, 1, 1], [], []>} : vector<16x96xf32>, vector<96x128xf32>, vector<16x128xf32> -> vector<16x128xf32>
    %71 = arith.addf %66, %70 : vector<16x128xf32>
    %c2_74 = arith.constant 2 : index
    %c0_75 = arith.constant 0 : index
    %72 = vector.load %arg12[%c2_74, %c0_75] : memref<18x128xf32, #tpu.memory_space<vmem>>, vector<16x128xf32>
    %c2_76 = arith.constant 2 : index
    %c0_77 = arith.constant 0 : index
    %c0_78 = arith.constant 0 : index
    %73 = vector.load %arg4[%c2_76, %c0_77, %c0_78] : memref<3x128x128xf32, #tpu.memory_space<vmem>>, vector<1x128x128xf32>
    %74 = vector.shape_cast %73 : vector<1x128x128xf32> to vector<128x128xf32>
    %cst_79 = arith.constant dense<0.000000e+00> : vector<16x128xf32>
    %75 = tpu.matmul %72, %74, %cst_79 {dimension_numbers = #tpu.dot_dimension_numbers<[1], [0], [0], [1], [0, 0, 1, 1], [], []>} : vector<16x128xf32>, vector<128x128xf32>, vector<16x128xf32> -> vector<16x128xf32>
    %76 = arith.addf %71, %75 : vector<16x128xf32>
    %c2_80 = arith.constant 2 : index
    %c0_81 = arith.constant 0 : index
    %77 = vector.load %arg13[%c2_80, %c0_81] : memref<18x96xf32, #tpu.memory_space<vmem>>, vector<16x96xf32>
    %c2_82 = arith.constant 2 : index
    %c0_83 = arith.constant 0 : index
    %c0_84 = arith.constant 0 : index
    %78 = vector.load %arg5[%c2_82, %c0_83, %c0_84] : memref<3x96x128xf32, #tpu.memory_space<vmem>>, vector<1x96x128xf32>
    %79 = vector.shape_cast %78 : vector<1x96x128xf32> to vector<96x128xf32>
    %cst_85 = arith.constant dense<0.000000e+00> : vector<16x128xf32>
    %80 = tpu.matmul %77, %79, %cst_85 {dimension_numbers = #tpu.dot_dimension_numbers<[1], [0], [0], [1], [0, 0, 1, 1], [], []>} : vector<16x96xf32>, vector<96x128xf32>, vector<16x128xf32> -> vector<16x128xf32>
    %81 = arith.addf %76, %80 : vector<16x128xf32>
    %c0_86 = arith.constant 0 : index
    %c0_87 = arith.constant 0 : index
    %82 = vector.load %arg8[%c0_86, %c0_87] : memref<1x128xf32, #tpu.memory_space<vmem>>, vector<1x128xf32>
    %83 = vector.shape_cast %82 : vector<1x128xf32> to vector<128xf32>
    %84 = vector.shape_cast %83 : vector<128xf32> to vector<1x128xf32>
    %85 = vector.broadcast %84 : vector<1x128xf32> to vector<16x128xf32>
    %86 = arith.mulf %81, %85 : vector<16x128xf32>
    %c0_88 = arith.constant 0 : index
    %c0_89 = arith.constant 0 : index
    %87 = vector.load %arg9[%c0_88, %c0_89] : memref<1x128xf32, #tpu.memory_space<vmem>>, vector<1x128xf32>
    %88 = vector.shape_cast %87 : vector<1x128xf32> to vector<128xf32>
    %89 = vector.shape_cast %88 : vector<128xf32> to vector<1x128xf32>
    %90 = vector.broadcast %89 : vector<1x128xf32> to vector<16x128xf32>
    %91 = arith.addf %86, %90 : vector<16x128xf32>
    %cst_90 = arith.constant 0.000000e+00 : f32
    %92 = vector.broadcast %cst_90 : f32 to vector<16x128xf32>
    %93 = arith.maximumf %91, %92 : vector<16x128xf32>
    %c0_91 = arith.constant 0 : index
    %c0_92 = arith.constant 0 : index
    %c0_93 = arith.constant 0 : index
    %94 = vector.load %arg10[%c0_91, %c0_92, %c0_93] : memref<1x16x128xf32, #tpu.memory_space<vmem>>, vector<1x16x128xf32>
    %95 = vector.shape_cast %94 : vector<1x16x128xf32> to vector<16x128xf32>
    %96 = vector.shape_cast %93 : vector<16x128xf32> to vector<1x16x128xf32>
    tpu.vector_store %arg10[%c0_91, %c0_92, %c0_93], %96 {strides = array<i32>} : memref<1x16x128xf32, #tpu.memory_space<vmem>>, vector<1x16x128xf32>,
    return
  }
  func.func @transform_0(%arg0: i32) -> (i32, i32, i32) {
    %c0_i32 = arith.constant 0 : i32
    %c0_i32_0 = arith.constant 0 : i32
    %c0_i32_1 = arith.constant 0 : i32
    return %arg0, %c0_i32, %c0_i32_0 : i32, i32, i32
  }
  func.func @transform_1(%arg0: i32) -> (i32, i32, i32) {
    %c0_i32 = arith.constant 0 : i32
    %c0_i32_0 = arith.constant 0 : i32
    %c0_i32_1 = arith.constant 0 : i32
    return %arg0, %c0_i32, %c0_i32_0 : i32, i32, i32
  }
  func.func @transform_2(%arg0: i32) -> (i32, i32, i32) {
    %c0_i32 = arith.constant 0 : i32
    %c0_i32_0 = arith.constant 0 : i32
    %c0_i32_1 = arith.constant 0 : i32
    %c0_i32_2 = arith.constant 0 : i32
    return %c0_i32, %c0_i32_0, %c0_i32_1 : i32, i32, i32
  }
  func.func @transform_3(%arg0: i32) -> (i32, i32, i32) {
    %c0_i32 = arith.constant 0 : i32
    %c0_i32_0 = arith.constant 0 : i32
    %c0_i32_1 = arith.constant 0 : i32
    %c0_i32_2 = arith.constant 0 : i32
    return %c0_i32, %c0_i32_0, %c0_i32_1 : i32, i32, i32
  }
  func.func @transform_4(%arg0: i32) -> (i32, i32, i32) {
    %c0_i32 = arith.constant 0 : i32
    %c0_i32_0 = arith.constant 0 : i32
    %c0_i32_1 = arith.constant 0 : i32
    %c0_i32_2 = arith.constant 0 : i32
    return %c0_i32, %c0_i32_0, %c0_i32_1 : i32, i32, i32
  }
  func.func @transform_5(%arg0: i32) -> (i32, i32) {
    %c0_i32 = arith.constant 0 : i32
    %c0_i32_0 = arith.constant 0 : i32
    %c0_i32_1 = arith.constant 0 : i32
    return %c0_i32, %c0_i32_0 : i32, i32
  }
  func.func @transform_6(%arg0: i32) -> (i32, i32) {
    %c0_i32 = arith.constant 0 : i32
    %c0_i32_0 = arith.constant 0 : i32
    %c0_i32_1 = arith.constant 0 : i32
    return %c0_i32, %c0_i32_0 : i32, i32
  }
  func.func @transform_7(%arg0: i32) -> (i32, i32) {
    %c0_i32 = arith.constant 0 : i32
    %c0_i32_0 = arith.constant 0 : i32
    %c0_i32_1 = arith.constant 0 : i32
    return %c0_i32, %c0_i32_0 : i32, i32
  }
  func.func @transform_8(%arg0: i32) -> (i32, i32) {
    %c0_i32 = arith.constant 0 : i32
    %c0_i32_0 = arith.constant 0 : i32
    %c0_i32_1 = arith.constant 0 : i32
    return %c0_i32, %c0_i32_0 : i32, i32
  }
  func.func @transform_9(%arg0: i32) -> (i32, i32, i32) {
    %c0_i32 = arith.constant 0 : i32
    %c0_i32_0 = arith.constant 0 : i32
    %c0_i32_1 = arith.constant 0 : i32
    return %arg0, %c0_i32, %c0_i32_0 : i32, i32, i32
  }
}

</mosaic_0001>

<llo_original>
// kernel: tpu_custom_call.1
$region0: #{tpu_custom_call.1}
  #allocation0 [shape = 'u32[]', space=smem, size = 0x4, offset = 0x4, fixed_abs, tag = 'smem constant byte address 0x4 - core index']
  #allocation1 [shape = 'u32[144,128]{1,0:T(1,128)}', space=vmem, size = 0x12000, scoped, tag = 'internal scratch']
  #allocation2 [shape = 'f32[18,32]{1,0:T(8,128)}', space=vmem, size = 0x3000, scoped, tag = 'scratch operand']
  #allocation3 [shape = 'f32[18,128]{1,0:T(8,128)}', space=vmem, size = 0x3000, scoped, tag = 'scratch operand']
  #allocation4 [shape = 'f32[18,96]{1,0:T(8,128)}', space=vmem, size = 0x3000, scoped, tag = 'scratch operand']
  %s0 = inlined_call_operand.hbm [shape: f32[2,8,32], index: 0, kind: input, shape index: {}]
  %s1 = inlined_call_operand.hbm [shape: f32[2,16,96], index: 1, kind: input, shape index: {}]
  %s2 = inlined_call_operand.hbm [shape: f32[3,32,128], index: 2, kind: input, shape index: {}]
  %s3 = inlined_call_operand.hbm [shape: f32[3,128,128], index: 3, kind: input, shape index: {}]
  %s4 = inlined_call_operand.hbm [shape: f32[3,96,128], index: 4, kind: input, shape index: {}]
  %s5 = inlined_call_operand.vmem [shape: f32[1,128], index: 5, kind: input, shape index: {}]
  %s6 = inlined_call_operand.vmem [shape: f32[1,128], index: 6, kind: input, shape index: {}]
  %s7 = inlined_call_operand.vmem [shape: f32[1,128], index: 7, kind: input, shape index: {}]
  %s8 = inlined_call_operand.vmem [shape: f32[1,128], index: 8, kind: input, shape index: {}]
  %s9 = inlined_call_operand.hbm [shape: f32[2,16,128], index: 9, kind: output, shape index: {}]
  %s10 = sld [smem:[#allocation0]]
  $region89: #{tpu_custom_call.1} parent=0
    _
  %s12 = ssub.s32 1, %s10
  %s13 = scalar_select 0, %s12, %s10
  $region1: #{tpu_custom_call.1} parent=0
    #allocation5 [shape = 'u8[8192]{0}', space=vmem, size = 0x2000, scoped, tag = 'input window, operand 0']
    #allocation6 [shape = 's32[2]{0}', space=sflag, size = 0x8, scoped, tag = 'scoped memory for tpu_custom_call.1']
    #allocation7 [shape = 's32[2]{0}', space=sflag, size = 0x8, scoped, tag = 'scoped memory for tpu_custom_call.1']
    #allocation8 [shape = 'u8[16384]{0}', space=vmem, size = 0x4000, scoped, tag = 'input window, operand 1']
    #allocation9 [shape = 's32[2]{0}', space=sflag, size = 0x8, scoped, tag = 'scoped memory for tpu_custom_call.1']
    #allocation10 [shape = 'u8[49152]{0}', space=vmem, size = 0xc000, scoped, tag = 'input window, operand 2, single buffered']
    #allocation11 [shape = 'u8[196608]{0}', space=vmem, size = 0x30000, scoped, tag = 'input window, operand 3, single buffered']
    #allocation12 [shape = 's32[1]{0}', space=sflag, size = 0x4, scoped, tag = 'scoped memory for tpu_custom_call.1']
    #allocation13 [shape = 'u8[147456]{0}', space=vmem, size = 0x24000, scoped, tag = 'input window, operand 4, single buffered']
    #allocation14 [shape = 'u8[16384]{0}', space=vmem, size = 0x4000, scoped, tag = 'output window, operand 0']
    %14 = vsyncpa [#allocation6], 0
    %s15 = scalar_lea.sflag [#allocation6], 1
    %16 = vsyncpa %s15, 0
    %17 = vsyncpa [#allocation9], 0
    %s18 = scalar_lea.sflag [#allocation9], 1
    %19 = vsyncpa %s18, 0
    %20 = vsyncpa [#allocation12], 0
    %21 = vsyncpa [#allocation7], 0
    %s22 = scalar_lea.sflag [#allocation7], 1
    %23 = vsyncpa %s22, 0
    loop: start=0, step=1, limit=4
    $region2: #{tpu_custom_call.1} parent=1 // loop_pre_header
      _
    $region3: #{tpu_custom_call.1} parent=1 // loop_header
      %s25 = sphi 0, %s29
      %p26 = scmp.ge.s32.totalorder %s25, 4
      %s35 = sphi 0, %s37
      %s38 = sphi 0, %s35
      %s39 = sphi 0, %s38
      %s55 = sphi 0, %s39
      %s61 = sphi 0, %s63
      %s64 = sphi 0, %s61
      %s65 = sphi 0, %s64
      %s81 = sphi 0, %s65
      %s85 = sphi 0, %s85
      %s87 = sphi 0, %s85
      %s88 = sphi 0, %s87
      %s102 = sphi 0, %s88
      %s106 = sphi 0, %s106
      %s108 = sphi 0, %s106
      %s109 = sphi 0, %s108
      %s123 = sphi 0, %s109
      %s127 = sphi 0, %s127
      %s129 = sphi 0, %s127
      %s130 = sphi 0, %s129
      %s144 = sphi 0, %s130
      %s148 = sphi 0, %s148
      %s150 = sphi 0, %s148
      %s151 = sphi 0, %s150
      %s165 = sphi 0, %s151
      %s169 = sphi 0, %s169
      %s171 = sphi 0, %s169
      %s172 = sphi 0, %s171
      %s186 = sphi 0, %s172
      %s190 = sphi 0, %s190
      %s192 = sphi 0, %s190
      %s193 = sphi 0, %s192
      %s207 = sphi 0, %s193
      %s211 = sphi 0, %s211
      %s213 = sphi 0, %s211
      %s214 = sphi 0, %s213
      %s228 = sphi 0, %s214
      %s234 = sphi 0, %s236
      %s237 = sphi 0, %s234
      %s238 = sphi 0, %s237
      %s254 = sphi 0, %s238
    $region4: #{tpu_custom_call.1} parent=1 // loop_header_branch
      %28 = sbr.rel (%p26) target = $region8
    $region5: #{tpu_custom_call.1} parent=1 // loop_body
      %s30 = ssub.s32 %s25, 1
      %s31 = ssub.s32 %s25, 2
      %s32 = sadd.s32 %s25, 1
      %s33 = ssub.s32 %s25, %s32
      %p34 = scmp.eq.s32.totalorder %s33, 0
      %s36 = sadd.s32 %s35, 1
      %s37 = scalar_select %p34, %s35, %s36
      %p40 = pneg %p34
      %p41 = scmp.eq.s32.totalorder %s25, 1
      %p42 = por %p40, %p41
      %p43 = scmp.ne.s32.totalorder %s35, %s38
      %p44 = scmp.eq.s32.totalorder %s25, 0
      %p45 = por %p43, %p44
      %p46 = scmp.ne.s32.totalorder %s35, %s38
      %p47 = scmp.eq.s32.totalorder %s30, 1
      %p48 = por %p46, %p47
      %p49 = scmp.ne.s32.totalorder %s38, %s39
      %p50 = scmp.eq.s32.totalorder %s30, 0
      %p51 = por %p49, %p50
      %p52 = scmp.ne.s32.totalorder %s38, %s39
      %p53 = scmp.eq.s32.totalorder %s31, 1
      %p54 = por %p52, %p53
      %p56 = scmp.ne.s32.totalorder %s39, %s55
      %p57 = scmp.eq.s32.totalorder %s31, 0
      %p58 = por %p56, %p57
      %s59 = ssub.s32 %s25, %s32
      %p60 = scmp.eq.s32.totalorder %s59, 0
      %s62 = sadd.s32 %s61, 1
      %s63 = scalar_select %p60, %s61, %s62
      %p66 = pneg %p60
      %p67 = scmp.eq.s32.totalorder %s25, 1
      %p68 = por %p66, %p67
      %p69 = scmp.ne.s32.totalorder %s61, %s64
      %p70 = scmp.eq.s32.totalorder %s25, 0
      %p71 = por %p69, %p70
      %p72 = scmp.ne.s32.totalorder %s61, %s64
      %p73 = scmp.eq.s32.totalorder %s30, 1
      %p74 = por %p72, %p73
      %p75 = scmp.ne.s32.totalorder %s64, %s65
      %p76 = scmp.eq.s32.totalorder %s30, 0
      %p77 = por %p75, %p76
      %p78 = scmp.ne.s32.totalorder %s64, %s65
      %p79 = scmp.eq.s32.totalorder %s31, 1
      %p80 = por %p78, %p79
      %p82 = scmp.ne.s32.totalorder %s65, %s81
      %p83 = scmp.eq.s32.totalorder %s31, 0
      %p84 = por %p82, %p83
      %s86 = sadd.s32 %s85, 1
      %p89 = scmp.eq.s32.totalorder %s25, 1
      %p90 = scmp.ne.s32.totalorder %s85, %s87
      %p91 = scmp.eq.s32.totalorder %s25, 0
      %p92 = por %p90, %p91
      %p93 = scmp.ne.s32.totalorder %s85, %s87
      %p94 = scmp.eq.s32.totalorder %s30, 1
      %p95 = por %p93, %p94
      %p96 = scmp.ne.s32.totalorder %s87, %s88
      %p97 = scmp.eq.s32.totalorder %s30, 0
      %p98 = por %p96, %p97
      %p99 = scmp.ne.s32.totalorder %s87, %s88
      %p100 = scmp.eq.s32.totalorder %s31, 1
      %p101 = por %p99, %p100
      %p103 = scmp.ne.s32.totalorder %s88, %s102
      %p104 = scmp.eq.s32.totalorder %s31, 0
      %p105 = por %p103, %p104
      %s107 = sadd.s32 %s106, 1
      %p110 = scmp.eq.s32.totalorder %s25, 1
      %p111 = scmp.ne.s32.totalorder %s106, %s108
      %p112 = scmp.eq.s32.totalorder %s25, 0
      %p113 = por %p111, %p112
      %p114 = scmp.ne.s32.totalorder %s106, %s108
      %p115 = scmp.eq.s32.totalorder %s30, 1
      %p116 = por %p114, %p115
      %p117 = scmp.ne.s32.totalorder %s108, %s109
      %p118 = scmp.eq.s32.totalorder %s30, 0
      %p119 = por %p117, %p118
      %p120 = scmp.ne.s32.totalorder %s108, %s109
      %p121 = scmp.eq.s32.totalorder %s31, 1
      %p122 = por %p120, %p121
      %p124 = scmp.ne.s32.totalorder %s109, %s123
      %p125 = scmp.eq.s32.totalorder %s31, 0
      %p126 = por %p124, %p125
      %s128 = sadd.s32 %s127, 1
      %p131 = scmp.eq.s32.totalorder %s25, 1
      %p132 = scmp.ne.s32.totalorder %s127, %s129
      %p133 = scmp.eq.s32.totalorder %s25, 0
      %p134 = por %p132, %p133
      %p135 = scmp.ne.s32.totalorder %s127, %s129
      %p136 = scmp.eq.s32.totalorder %s30, 1
      %p137 = por %p135, %p136
      %p138 = scmp.ne.s32.totalorder %s129, %s130
      %p139 = scmp.eq.s32.totalorder %s30, 0
      %p140 = por %p138, %p139
      %p141 = scmp.ne.s32.totalorder %s129, %s130
      %p142 = scmp.eq.s32.totalorder %s31, 1
      %p143 = por %p141, %p142
      %p145 = scmp.ne.s32.totalorder %s130, %s144
      %p146 = scmp.eq.s32.totalorder %s31, 0
      %p147 = por %p145, %p146
      %s149 = sadd.s32 %s148, 1
      %p152 = scmp.eq.s32.totalorder %s25, 1
      %p153 = scmp.ne.s32.totalorder %s148, %s150
      %p154 = scmp.eq.s32.totalorder %s25, 0
      %p155 = por %p153, %p154
      %p156 = scmp.ne.s32.totalorder %s148, %s150
      %p157 = scmp.eq.s32.totalorder %s30, 1
      %p158 = por %p156, %p157
      %p159 = scmp.ne.s32.totalorder %s150, %s151
      %p160 = scmp.eq.s32.totalorder %s30, 0
      %p161 = por %p159, %p160
      %p162 = scmp.ne.s32.totalorder %s150, %s151
      %p163 = scmp.eq.s32.totalorder %s31, 1
      %p164 = por %p162, %p163
      %p166 = scmp.ne.s32.totalorder %s151, %s165
      %p167 = scmp.eq.s32.totalorder %s31, 0
      %p168 = por %p166, %p167
      %s170 = sadd.s32 %s169, 1
      %p173 = scmp.eq.s32.totalorder %s25, 1
      %p174 = scmp.ne.s32.totalorder %s169, %s171
      %p175 = scmp.eq.s32.totalorder %s25, 0
      %p176 = por %p174, %p175
      %p177 = scmp.ne.s32.totalorder %s169, %s171
      %p178 = scmp.eq.s32.totalorder %s30, 1
      %p179 = por %p177, %p178
      %p180 = scmp.ne.s32.totalorder %s171, %s172
      %p181 = scmp.eq.s32.totalorder %s30, 0
      %p182 = por %p180, %p181
      %p183 = scmp.ne.s32.totalorder %s171, %s172
      %p184 = scmp.eq.s32.totalorder %s31, 1
      %p185 = por %p183, %p184
      %p187 = scmp.ne.s32.totalorder %s172, %s186
      %p188 = scmp.eq.s32.totalorder %s31, 0
      %p189 = por %p187, %p188
      %s191 = sadd.s32 %s190, 1
      %p194 = scmp.eq.s32.totalorder %s25, 1
      %p195 = scmp.ne.s32.totalorder %s190, %s192
      %p196 = scmp.eq.s32.totalorder %s25, 0
      %p197 = por %p195, %p196
      %p198 = scmp.ne.s32.totalorder %s190, %s192
      %p199 = scmp.eq.s32.totalorder %s30, 1
      %p200 = por %p198, %p199
      %p201 = scmp.ne.s32.totalorder %s192, %s193
      %p202 = scmp.eq.s32.totalorder %s30, 0
      %p203 = por %p201, %p202
      %p204 = scmp.ne.s32.totalorder %s192, %s193
      %p205 = scmp.eq.s32.totalorder %s31, 1
      %p206 = por %p204, %p205
      %p208 = scmp.ne.s32.totalorder %s193, %s207
      %p209 = scmp.eq.s32.totalorder %s31, 0
      %p210 = por %p208, %p209
      %s212 = sadd.s32 %s211, 1
      %p215 = scmp.eq.s32.totalorder %s25, 1
      %p216 = scmp.ne.s32.totalorder %s211, %s213
      %p217 = scmp.eq.s32.totalorder %s25, 0
      %p218 = por %p216, %p217
      %p219 = scmp.ne.s32.totalorder %s211, %s213
      %p220 = scmp.eq.s32.totalorder %s30, 1
      %p221 = por %p219, %p220
      %p222 = scmp.ne.s32.totalorder %s213, %s214
      %p223 = scmp.eq.s32.totalorder %s30, 0
      %p224 = por %p222, %p223
      %p225 = scmp.ne.s32.totalorder %s213, %s214
      %p226 = scmp.eq.s32.totalorder %s31, 1
      %p227 = por %p225, %p226
      %p229 = scmp.ne.s32.totalorder %s214, %s228
      %p230 = scmp.eq.s32.totalorder %s31, 0
      %p231 = por %p229, %p230
      %s232 = ssub.s32 %s25, %s32
      %p233 = scmp.eq.s32.totalorder %s232, 0
      %s235 = sadd.s32 %s234, 1
      %s236 = scalar_select %p233, %s234, %s235
      %p239 = pneg %p233
      %p240 = scmp.eq.s32.totalorder %s25, 1
      %p241 = por %p239, %p240
      %p242 = scmp.ne.s32.totalorder %s234, %s237
      %p243 = scmp.eq.s32.totalorder %s25, 0
      %p244 = por %p242, %p243
      %p245 = scmp.ne.s32.totalorder %s234, %s237
      %p246 = scmp.eq.s32.totalorder %s30, 1
      %p247 = por %p245, %p246
      %p248 = scmp.ne.s32.totalorder %s237, %s238
      %p249 = scmp.eq.s32.totalorder %s30, 0
      %p250 = por %p248, %p249
      %p251 = scmp.ne.s32.totalorder %s237, %s238
      %p252 = scmp.eq.s32.totalorder %s31, 1
      %p253 = por %p251, %p252
      %p255 = scmp.ne.s32.totalorder %s238, %s254
      %p256 = scmp.eq.s32.totalorder %s31, 0
      %p257 = por %p255, %p256
      %p258 = scmp.le.s32.totalorder 1, %s25
      %p259 = scmp.lt.s32.totalorder %s25, 3
      %p260 = pnand %p258, %p259
      %p261 = pneg %p260
      // Predicated region
      $region9: #{tpu_custom_call.1} parent=5 // pred_check
        _
      $region10: #{tpu_custom_call.1} parent=5 // pred_check_branch
        %263 = sbr.rel (%p260) target = $region12
      $region11: #{tpu_custom_call.1} parent=5 // pred_region
        %s264 = ssub.s32 %s25, 1
        // Predicated region
        $region13: #{tpu_custom_call.1} parent=11 // pred_check
          %p265 = pneg %p98
        $region14: #{tpu_custom_call.1} parent=11 // pred_check_branch
          %267 = sbr.rel (%p265) target = $region16
        $region15: #{tpu_custom_call.1} parent=11 // pred_region
          %s269 = ssub.s32 1536, 1536
          %270 = vsyncadd [#allocation9], %s269
          %s271 = sshll.u32 [#allocation10], 4
          %s272 = int_to_ptr.vmem [resolvable:$true] %s271
          %277 = dma.hbm_to_vmem [thread:$0]  %s2, 1536, %s272, [#allocation9], 128, 128, 8
        $region16: #{tpu_custom_call.1} parent=11 // pred_fallthru
          _
        // Predicated region
        $region17: #{tpu_custom_call.1} parent=11 // pred_check
          %p278 = pneg %p119
        $region18: #{tpu_custom_call.1} parent=11 // pred_check_branch
          %280 = sbr.rel (%p278) target = $region20
        $region19: #{tpu_custom_call.1} parent=11 // pred_region
          %s282 = ssub.s32 6144, 6144
          %283 = vsyncadd [#allocation12], %s282
          %s284 = sshll.u32 [#allocation11], 4
          %s285 = int_to_ptr.vmem [resolvable:$true] %s284
          %290 = dma.hbm_to_vmem [thread:$0]  %s3, 6144, %s285, [#allocation12], 128, 128, 8
        $region20: #{tpu_custom_call.1} parent=11 // pred_fallthru
          _
        // Predicated region
        $region21: #{tpu_custom_call.1} parent=11 // pred_check
          %p291 = pneg %p140
        $region22: #{tpu_custom_call.1} parent=11 // pred_check_branch
          %293 = sbr.rel (%p291) target = $region24
        $region23: #{tpu_custom_call.1} parent=11 // pred_region
          %s295 = ssub.s32 4608, 4608
          %296 = vsyncadd [#allocation12], %s295
          %s297 = sshll.u32 [#allocation13], 4
          %s298 = int_to_ptr.vmem [resolvable:$true] %s297
          %303 = dma.hbm_to_vmem [thread:$0]  %s4, 4608, %s298, [#allocation12], 128, 128, 8
        $region24: #{tpu_custom_call.1} parent=11 // pred_fallthru
          _
        // Predicated region
        $region25: #{tpu_custom_call.1} parent=11 // pred_check
          %p304 = pneg %p161
        $region26: #{tpu_custom_call.1} parent=11 // pred_check_branch
          %306 = sbr.rel (%p304) target = $region28
        $region27: #{tpu_custom_call.1} parent=11 // pred_region
          _
        $region28: #{tpu_custom_call.1} parent=11 // pred_fallthru
          _
        // Predicated region
        $region29: #{tpu_custom_call.1} parent=11 // pred_check
          %p307 = pneg %p182
        $region30: #{tpu_custom_call.1} parent=11 // pred_check_branch
          %309 = sbr.rel (%p307) target = $region32
        $region31: #{tpu_custom_call.1} parent=11 // pred_region
          _
        $region32: #{tpu_custom_call.1} parent=11 // pred_fallthru
          _
        // Predicated region
        $region33: #{tpu_custom_call.1} parent=11 // pred_check
          %p310 = pneg %p203
        $region34: #{tpu_custom_call.1} parent=11 // pred_check_branch
          %312 = sbr.rel (%p310) target = $region36
        $region35: #{tpu_custom_call.1} parent=11 // pred_region
          _
        $region36: #{tpu_custom_call.1} parent=11 // pred_fallthru
          _
        // Predicated region
        $region37: #{tpu_custom_call.1} parent=11 // pred_check
          %p313 = pneg %p224
        $region38: #{tpu_custom_call.1} parent=11 // pred_check_branch
          %315 = sbr.rel (%p313) target = $region40
        $region39: #{tpu_custom_call.1} parent=11 // pred_region
          _
        $region40: #{tpu_custom_call.1} parent=11 // pred_fallthru
          _
      $region12: #{tpu_custom_call.1} parent=5 // pred_fallthru
        _
      %p316 = scmp.lt.s32.totalorder %s25, 2
      // Predicated region
      $region41: #{tpu_custom_call.1} parent=5 // pred_check
        %p317 = pneg %p316
      $region42: #{tpu_custom_call.1} parent=5 // pred_check_branch
        %319 = sbr.rel (%p317) target = $region44
      $region43: #{tpu_custom_call.1} parent=5 // pred_region
        // Predicated region
        $region45: #{tpu_custom_call.1} parent=43 // pred_check
          %p320 = pneg %p45
        $region46: #{tpu_custom_call.1} parent=43 // pred_check_branch
          %322 = sbr.rel (%p320) target = $region48
        $region47: #{tpu_custom_call.1} parent=43 // pred_region
          %s323 = sand.u32 %s35, 1
          %s324 = scalar_lea.sflag [#allocation6], %s323
          %s325 = sand.u32 %s35, 1
          %s326 = smul.addr %s325, 8
          %s327 = scalar_lea.vmem [#allocation5], %s326
          %s329 = ssub.s32 128, 128
          %330 = vsyncadd %s324, %s329
          %s331 = smul.addr %s25, 128
          %s332 = scalar_lea.hbm %s0, %s331
          %s334 = sshll.u32 %s327, 4
          %s335 = int_to_ptr.vmem [resolvable:$true] %s334
          %337 = dma.hbm_to_vmem [thread:$0]  %s332, 128, %s335, %s324
        $region48: #{tpu_custom_call.1} parent=43 // pred_fallthru
          _
        // Predicated region
        $region49: #{tpu_custom_call.1} parent=43 // pred_check
          %p338 = pneg %p71
        $region50: #{tpu_custom_call.1} parent=43 // pred_check_branch
          %340 = sbr.rel (%p338) target = $region52
        $region51: #{tpu_custom_call.1} parent=43 // pred_region
          %s341 = sand.u32 %s25, 1
          %s342 = scalar_lea.sflag [#allocation9], %s341
          %s343 = sand.u32 %s61, 1
          %s344 = smul.addr %s343, 16
          %s345 = scalar_lea.vmem [#allocation8], %s344
          %s347 = ssub.s32 256, 256
          %348 = vsyncadd %s342, %s347
          %s349 = smul.addr %s25, 2
          %s350 = smul.addr %s349, 128
          %s351 = scalar_lea.hbm %s1, %s350
          %s352 = sshll.u32 %s345, 4
          %s353 = int_to_ptr.vmem [resolvable:$true] %s352
          %358 = dma.hbm_to_vmem [thread:$0]  %s351, 256, %s353, %s342, 128, 128, 8
        $region52: #{tpu_custom_call.1} parent=43 // pred_fallthru
          _
      $region44: #{tpu_custom_call.1} parent=5 // pred_fallthru
        _
      %p359 = scmp.le.s32.totalorder 1, %s25
      %p360 = scmp.lt.s32.totalorder %s25, 3
      %p361 = pnand %p359, %p360
      %p362 = pneg %p361
      // Predicated region
      $region53: #{tpu_custom_call.1} parent=5 // pred_check
        _
      $region54: #{tpu_custom_call.1} parent=5 // pred_check_branch
        %364 = sbr.rel (%p361) target = $region56
      $region55: #{tpu_custom_call.1} parent=5 // pred_region
        %s365 = ssub.s32 %s25, 1
        %s366 = sand.u32 %s38, 1
        %s367 = scalar_lea.sflag [#allocation6], %s366
        %s368 = sand.u32 %s38, 1
        %s369 = smul.addr %s368, 8
        %s370 = scalar_lea.vmem [#allocation5], %s369
        // Predicated region
        $region57: #{tpu_custom_call.1} parent=55 // pred_check
          %p371 = pneg %p51
        $region58: #{tpu_custom_call.1} parent=55 // pred_check_branch
          %373 = sbr.rel (%p371) target = $region60
        $region59: #{tpu_custom_call.1} parent=55 // pred_region
          %374 = dma.done %s367, 128
        $region60: #{tpu_custom_call.1} parent=55 // pred_fallthru
          _
        %s375 = sand.u32 %s30, 1
        %s376 = scalar_lea.sflag [#allocation9], %s375
        %s377 = sand.u32 %s64, 1
        %s378 = smul.addr %s377, 16
        %s379 = scalar_lea.vmem [#allocation8], %s378
        // Predicated region
        $region61: #{tpu_custom_call.1} parent=55 // pred_check
          %p380 = pneg %p77
        $region62: #{tpu_custom_call.1} parent=55 // pred_check_branch
          %382 = sbr.rel (%p380) target = $region64
        $region63: #{tpu_custom_call.1} parent=55 // pred_region
          %383 = dma.done %s376, 256
        $region64: #{tpu_custom_call.1} parent=55 // pred_fallthru
          _
        // Predicated region
        $region65: #{tpu_custom_call.1} parent=55 // pred_check
          %p384 = pneg %p98
        $region66: #{tpu_custom_call.1} parent=55 // pred_check_branch
          %386 = sbr.rel (%p384) target = $region68
        $region67: #{tpu_custom_call.1} parent=55 // pred_region
          %387 = dma.done [#allocation9], 1536
        $region68: #{tpu_custom_call.1} parent=55 // pred_fallthru
          _
        // Predicated region
        $region69: #{tpu_custom_call.1} parent=55 // pred_check
          %p388 = pneg %p119
        $region70: #{tpu_custom_call.1} parent=55 // pred_check_branch
          %390 = sbr.rel (%p388) target = $region72
        $region71: #{tpu_custom_call.1} parent=55 // pred_region
          %391 = dma.done [#allocation12], 6144
        $region72: #{tpu_custom_call.1} parent=55 // pred_fallthru
          _
        // Predicated region
        $region73: #{tpu_custom_call.1} parent=55 // pred_check
          %p392 = pneg %p140
        $region74: #{tpu_custom_call.1} parent=55 // pred_check_branch
          %394 = sbr.rel (%p392) target = $region76
        $region75: #{tpu_custom_call.1} parent=55 // pred_region
          %395 = dma.done [#allocation12], 4608
        $region76: #{tpu_custom_call.1} parent=55 // pred_fallthru
          _
        %s396 = sand.u32 %s38, 1
        %s397 = scalar_lea.sflag [#allocation6], %s396
        %s398 = sand.u32 %s38, 1
        %s399 = smul.addr %s398, 8
        %s400 = scalar_lea.vmem [#allocation5], %s399
        %p401 = pneg %p51
        %p402 = pneg %p48
        %s403 = sand.u32 %s30, 1
        %s404 = scalar_lea.sflag [#allocation9], %s403
        %s405 = sand.u32 %s64, 1
        %s406 = smul.addr %s405, 16
        %s407 = scalar_lea.vmem [#allocation8], %s406
        %p408 = pneg %p77
        %p409 = pneg %p74
        %p410 = pneg %p98
        %p411 = pneg %p95
        %p412 = pneg %p119
        %p413 = pneg %p116
        %p414 = pneg %p140
        %p415 = pneg %p137
        %p416 = pneg %p161
        %p417 = pneg %p158
        %p418 = pneg %p182
        %p419 = pneg %p179
        %p420 = pneg %p203
        %p421 = pneg %p200
        %p422 = pneg %p224
        %p423 = pneg %p221
        %p424 = pneg %p250
        %p425 = pneg %p247
        %s426 = sand.u32 %s237, 1
        %s427 = scalar_lea.sflag [#allocation7], %s426
        %s428 = sand.u32 %s237, 1
        %s429 = smul.addr %s428, 16
        %s430 = scalar_lea.vmem [#allocation14], %s429
        %v431 = vld [vmem:[%s370] sm:$0xff]
        %v433 = vcombine.high %v431, %v431
        %v435 = vunpack.c.l.s4 1966171168
        %v436 = vunpack.c.0.s8 %v435
        %v437 = vlaneseq
        %v438 = vshrl.u32 %v437, 7
        %v439 = vsub.s32 %v436, %v438
        %v440 = vrot.slane %v431, %v439
        %v442 = vunpack.c.l.s4 1966171168
        %v443 = vunpack.c.0.s8 %v442
        %v444 = vlaneseq
        %v445 = vshrl.u32 %v444, 7
        %v446 = vsub.s32 %v443, %v445
        %v447 = vrot.slane %v433, %v446
        %v448 = vcombine.high %v440, %v440
        %v449 = vcombine.high %v447, %v447
        %v451 = vunpack.c.l.s4 1966171168
        %v452 = vunpack.c.0.s8 %v451
        %v453 = vlaneseq
        %v454 = vshrl.u32 %v453, 7
        %v455 = vsub.s32 %v452, %v454
        %v456 = vrot.slane %v440, %v455
        %v458 = vunpack.c.l.s4 1966171168
        %v459 = vunpack.c.0.s8 %v458
        %v460 = vlaneseq
        %v461 = vshrl.u32 %v460, 7
        %v462 = vsub.s32 %v459, %v461
        %v463 = vrot.slane %v447, %v462
        %v465 = vunpack.c.l.s4 1966171168
        %v466 = vunpack.c.0.s8 %v465
        %v467 = vlaneseq
        %v468 = vshrl.u32 %v467, 7
        %v469 = vsub.s32 %v466, %v468
        %v470 = vrot.slane %v448, %v469
        %v472 = vunpack.c.l.s4 1966171168
        %v473 = vunpack.c.0.s8 %v472
        %v474 = vlaneseq
        %v475 = vshrl.u32 %v474, 7
        %v476 = vsub.s32 %v473, %v475
        %v477 = vrot.slane %v449, %v476
        %v478 = vcombine.high %v456, %v456
        %v479 = vcombine.high %v463, %v463
        %v480 = vcombine.high %v470, %v470
        %v481 = vcombine.high %v477, %v477
        %v482 = vlaneseq
        %v483 = vshrl.u32 %v482, 7
        %v484 = vsub.s32 0, %v483
        %v485 = vrot.slane %v456, %v484
        %v486 = vlaneseq
        %v487 = vshrl.u32 %v486, 7
        %v488 = vsub.s32 0, %v487
        %v489 = vrot.slane %v470, %v488
        %v490 = vlaneseq
        %v491 = vshrl.u32 %v490, 7
        %v492 = vsub.s32 0, %v491
        %v493 = vrot.slane %v478, %v492
        %v494 = vlaneseq
        %v495 = vshrl.u32 %v494, 7
        %v496 = vsub.s32 0, %v495
        %v497 = vrot.slane %v480, %v496
        %v498 = vlaneseq
        %v499 = vshrl.u32 %v498, 7
        %v500 = vsub.s32 0, %v499
        %v501 = vrot.slane %v463, %v500
        %v502 = vlaneseq
        %v503 = vshrl.u32 %v502, 7
        %v504 = vsub.s32 0, %v503
        %v505 = vrot.slane %v477, %v504
        %v506 = vlaneseq
        %v507 = vshrl.u32 %v506, 7
        %v508 = vsub.s32 0, %v507
        %v509 = vrot.slane %v479, %v508
        %v510 = vlaneseq
        %v511 = vshrl.u32 %v510, 7
        %v512 = vsub.s32 0, %v511
        %v513 = vrot.slane %v481, %v512
        %vm514 = vcmask 253952
        %515 = vst.msk [vmem:[#allocation2] sm:$0x1] %vm514, 0.0
        %516 = vst.msk [vmem:[#allocation2 + $0x11] sm:$0x1] %vm514, 0.0
        %v517 = vcombine.low %v485, %v489
        %v518 = vcombine.low %v493, %v497
        %v520 = vunpack.c.l.s4 1983009808
        %v521 = vunpack.c.0.s8 %v520
        %v522 = vlaneseq
        %v523 = vshrl.u32 %v522, 7
        %v524 = vsub.s32 %v521, %v523
        %v525 = vrot.slane %v517, %v524
        %v527 = vunpack.c.l.s4 1983009808
        %v528 = vunpack.c.0.s8 %v527
        %v529 = vlaneseq
        %v530 = vshrl.u32 %v529, 7
        %v531 = vsub.s32 %v528, %v530
        %v532 = vrot.slane %v518, %v531
        %v533 = vcombine.low %v525, %v532
        %v534 = vcombine.low %v501, %v505
        %v535 = vcombine.low %v509, %v513
        %v537 = vunpack.c.l.s4 1983009808
        %v538 = vunpack.c.0.s8 %v537
        %v539 = vlaneseq
        %v540 = vshrl.u32 %v539, 7
        %v541 = vsub.s32 %v538, %v540
        %v542 = vrot.slane %v534, %v541
        %v544 = vunpack.c.l.s4 1983009808
        %v545 = vunpack.c.0.s8 %v544
        %v546 = vlaneseq
        %v547 = vshrl.u32 %v546, 7
        %v548 = vsub.s32 %v545, %v547
        %v549 = vrot.slane %v535, %v548
        %v550 = vcombine.low %v542, %v549
        %vm553 = vcmask 261120
        %554 = vst.msk [vmem:[#allocation2 + $0x1] sm:$0xff] %vm553, %v533
        %555 = vst.msk [vmem:[#allocation2 + $0x9] sm:$0xff] %vm553, %v550
        %vm556 = vcmask 778240
        %557 = vst.msk [vmem:[#allocation4] sm:$0x1] %vm556, 0.0
        %558 = vst.msk [vmem:[#allocation4 + $0x11] sm:$0x1] %vm556, 0.0
        %v559 = vld [vmem:[%s379] sm:$0xff]
        %v560 = vld [vmem:[%s379 + $0x8] sm:$0xff]
        %vm561 = vcmask 785408
        %562 = vst.msk [vmem:[#allocation4 + $0x1] sm:$0xff] %vm561, %v559
        %563 = vst.msk [vmem:[#allocation4 + $0x9] sm:$0xff] %vm561, %v560
        %v564 = vld [vmem:[#allocation2] sm:$0xff]
        %v565 = vld [vmem:[#allocation2 + $0x8] sm:$0xff]
        %v566 = vld [vmem:[#allocation10] sm:$0xff]
        %v567 = vld [vmem:[#allocation10 + $0x8] sm:$0xff]
        %v568 = vld [vmem:[#allocation10 + $0x10] sm:$0xff]
        %v569 = vld [vmem:[#allocation10 + $0x18] sm:$0xff]
        %v570 = vld [vmem:[#allocation2 + $0x1] sm:$0xff]
        %v571 = vld [vmem:[#allocation2 + $0x9] sm:$0xff]
        %s572 = scalar_lea.vmem [#allocation10], 32
        %v573 = vld [vmem:[%s572] sm:$0xff]
        %v574 = vld [vmem:[%s572 + $0x8] sm:$0xff]
        %v575 = vld [vmem:[%s572 + $0x10] sm:$0xff]
        %v576 = vld [vmem:[%s572 + $0x18] sm:$0xff]
        %v578 = vsel %vm553, %v570, 0
        %v581 = vsel %vm553, %v571, 0
        %583 = vmatprep.subr.mxu0 0.0
        %584 = vmatpush1.msra.mxu0 %v573
        %585 = vmatprep.subr.mxu0 0.0
        %586 = vmatpush1.msra.mxu0 %v574
        %587 = vmatprep.subr.mxu0 0.0
        %588 = vmatpush1.msra.mxu0 %v575
        %589 = vmatprep.subr.mxu0 0.0
        %590 = vmatpush1.msra.mxu0 %v576
        %591 = vmatprep.subr.mxu0 0.0
        %592 = vmatpush1.msra.mxu0 0.0
        %593 = vmatprep.subr.mxu0 0.0
        %594 = vmatpush1.msra.mxu0 0.0
        %595 = vmatprep.subr.mxu0 0.0
        %596 = vmatpush1.msra.mxu0 0.0
        %597 = vmatprep.subr.mxu0 0.0
        %598 = vmatpush1.msra.mxu0 0.0
        %599 = vmatprep.subr.mxu0 0.0
        %600 = vmatpush1.msra.mxu0 0.0
        %601 = vmatprep.subr.mxu0 0.0
        %602 = vmatpush1.msra.mxu0 0.0
        %603 = vmatprep.subr.mxu0 0.0
        %604 = vmatpush1.msra.mxu0 0.0
        %605 = vmatprep.subr.mxu0 0.0
        %606 = vmatpush1.msra.mxu0 0.0
        %607 = vmatprep.subr.mxu0 0.0
        %608 = vmatpush1.msra.mxu0 0.0
        %609 = vmatprep.subr.mxu0 0.0
        %610 = vmatpush1.msra.mxu0 0.0
        %611 = vmatprep.subr.mxu0 0.0
        %612 = vmatpush1.msra.mxu0 0.0
        %613 = vmatprep.subr.mxu0 0.0
        %614 = vmatpush1.msra.mxu0 0.0
        %615 = vmatprep.subr.mxu0 0.0
        %616 = vmatpush1.msra.mxu0 0.0
        %617 = vmatprep.subr.mxu0 0.0
        %618 = vmatpush1.msra.mxu0 0.0
        %619 = vmatprep.subr.mxu0 0.0
        %620 = vmatpush1.msra.mxu0 0.0
        %621 = vmatprep.subr.mxu0 0.0
        %622 = vmatpush1.msra.mxu0 0.0
        %623 = vmatprep.subr.mxu0 0.0
        %624 = vmatpush1.msra.mxu0 0.0
        %625 = vmatprep.subr.mxu0 0.0
        %626 = vmatpush1.msra.mxu0 0.0
        %627 = vmatprep.subr.mxu0 0.0
        %628 = vmatpush1.msra.mxu0 0.0
        %629 = vmatprep.subr.mxu0 0.0
        %630 = vmatpush1.msra.mxu0 0.0
        %631 = vmatprep.subr.mxu0 0.0
        %632 = vmatpush1.msra.mxu0 0.0
        %633 = vmatprep.subr.mxu0 0.0
        %634 = vmatpush1.msra.mxu0 0.0
        %635 = vmatprep.subr.mxu0 0.0
        %636 = vmatpush1.msra.mxu0 0.0
        %637 = vmatprep.subr.mxu0 0.0
        %638 = vmatpush1.msra.mxu0 0.0
        %639 = vmatprep.subr.mxu0 0.0
        %640 = vmatpush1.msra.mxu0 0.0
        %641 = vmatprep.subr.mxu0 0.0
        %642 = vmatpush1.msra.mxu0 0.0
        %643 = vmatprep.subr.mxu0 0.0
        %644 = vmatpush1.msra.mxu0 0.0
        %645 = vmatprep.subr.mxu0 0.0
        %646 = vmatpush1.msra.mxu0 0.0
        %647 = vmatprep.mubr.f32.mxu0 0.0
        %648 = vmatmul.mubr.f32.gmra.mrb[0].mxu0 %v578
        %v649 = vpop.f32.mrb[0].mxu0
        %v650 = vadd.f32 0.0, %v649
        %v651 = vpop.f32.mrb[0].mxu0
        %652 = vmatprep.mubr.f32.mxu0 0.0
        %653 = vmatmul.mubr.f32.gmra.mrb[0].mxu0 %v581
        %v654 = vpop.f32.mrb[0].mxu0
        %v655 = vadd.f32 0.0, %v654
        %v656 = vpop.f32.mrb[0].mxu0
        %657 = vdwg.mxu0
        %v659 = vsel %vm553, %v564, 0
        %v662 = vsel %vm553, %v565, 0
        %664 = vmatprep.subr.mxu0 0.0
        %665 = vmatpush1.msra.mxu0 %v566
        %666 = vmatprep.subr.mxu0 0.0
        %667 = vmatpush1.msra.mxu0 %v567
        %668 = vmatprep.subr.mxu0 0.0
        %669 = vmatpush1.msra.mxu0 %v568
        %670 = vmatprep.subr.mxu0 0.0
        %671 = vmatpush1.msra.mxu0 %v569
        %672 = vmatprep.subr.mxu0 0.0
        %673 = vmatpush1.msra.mxu0 0.0
        %674 = vmatprep.subr.mxu0 0.0
        %675 = vmatpush1.msra.mxu0 0.0
        %676 = vmatprep.subr.mxu0 0.0
        %677 = vmatpush1.msra.mxu0 0.0
        %678 = vmatprep.subr.mxu0 0.0
        %679 = vmatpush1.msra.mxu0 0.0
        %680 = vmatprep.subr.mxu0 0.0
        %681 = vmatpush1.msra.mxu0 0.0
        %682 = vmatprep.subr.mxu0 0.0
        %683 = vmatpush1.msra.mxu0 0.0
        %684 = vmatprep.subr.mxu0 0.0
        %685 = vmatpush1.msra.mxu0 0.0
        %686 = vmatprep.subr.mxu0 0.0
        %687 = vmatpush1.msra.mxu0 0.0
        %688 = vmatprep.subr.mxu0 0.0
        %689 = vmatpush1.msra.mxu0 0.0
        %690 = vmatprep.subr.mxu0 0.0
        %691 = vmatpush1.msra.mxu0 0.0
        %692 = vmatprep.subr.mxu0 0.0
        %693 = vmatpush1.msra.mxu0 0.0
        %694 = vmatprep.subr.mxu0 0.0
        %695 = vmatpush1.msra.mxu0 0.0
        %696 = vmatprep.subr.mxu0 0.0
        %697 = vmatpush1.msra.mxu0 0.0
        %698 = vmatprep.subr.mxu0 0.0
        %699 = vmatpush1.msra.mxu0 0.0
        %700 = vmatprep.subr.mxu0 0.0
        %701 = vmatpush1.msra.mxu0 0.0
        %702 = vmatprep.subr.mxu0 0.0
        %703 = vmatpush1.msra.mxu0 0.0
        %704 = vmatprep.subr.mxu0 0.0
        %705 = vmatpush1.msra.mxu0 0.0
        %706 = vmatprep.subr.mxu0 0.0
        %707 = vmatpush1.msra.mxu0 0.0
        %708 = vmatprep.subr.mxu0 0.0
        %709 = vmatpush1.msra.mxu0 0.0
        %710 = vmatprep.subr.mxu0 0.0
        %711 = vmatpush1.msra.mxu0 0.0
        %712 = vmatprep.subr.mxu0 0.0
        %713 = vmatpush1.msra.mxu0 0.0
        %714 = vmatprep.subr.mxu0 0.0
        %715 = vmatpush1.msra.mxu0 0.0
        %716 = vmatprep.subr.mxu0 0.0
        %717 = vmatpush1.msra.mxu0 0.0
        %718 = vmatprep.subr.mxu0 0.0
        %719 = vmatpush1.msra.mxu0 0.0
        %720 = vmatprep.subr.mxu0 0.0
        %721 = vmatpush1.msra.mxu0 0.0
        %722 = vmatprep.subr.mxu0 0.0
        %723 = vmatpush1.msra.mxu0 0.0
        %724 = vmatprep.subr.mxu0 0.0
        %725 = vmatpush1.msra.mxu0 0.0
        %726 = vmatprep.subr.mxu0 0.0
        %727 = vmatpush1.msra.mxu0 0.0
        %728 = vmatprep.mubr.f32.mxu0 0.0
        %729 = vmatmul.mubr.f32.gmra.mrb[0].mxu0 %v659
        %v730 = vpop.f32.mrb[0].mxu0
        %v731 = vadd.f32 %v650, %v730
        %v732 = vpop.f32.mrb[0].mxu0
        %733 = vmatprep.mubr.f32.mxu0 0.0
        %734 = vmatmul.mubr.f32.gmra.mrb[0].mxu0 %v662
        %v735 = vpop.f32.mrb[0].mxu0
        %v736 = vadd.f32 %v655, %v735
        %v737 = vpop.f32.mrb[0].mxu0
        %738 = vdwg.mxu0
        %v739 = vld [vmem:[#allocation2 + $0x2] sm:$0xff]
        %v740 = vld [vmem:[#allocation2 + $0xa] sm:$0xff]
        %s741 = scalar_lea.vmem [#allocation10], 64
        %v742 = vld [vmem:[%s741] sm:$0xff]
        %v743 = vld [vmem:[%s741 + $0x8] sm:$0xff]
        %v744 = vld [vmem:[%s741 + $0x10] sm:$0xff]
        %v745 = vld [vmem:[%s741 + $0x18] sm:$0xff]
        %v747 = vsel %vm553, %v739, 0
        %v750 = vsel %vm553, %v740, 0
        %752 = vmatprep.subr.mxu0 0.0
        %753 = vmatpush1.msra.mxu0 %v742
        %754 = vmatprep.subr.mxu0 0.0
        %755 = vmatpush1.msra.mxu0 %v743
        %756 = vmatprep.subr.mxu0 0.0
        %757 = vmatpush1.msra.mxu0 %v744
        %758 = vmatprep.subr.mxu0 0.0
        %759 = vmatpush1.msra.mxu0 %v745
        %760 = vmatprep.subr.mxu0 0.0
        %761 = vmatpush1.msra.mxu0 0.0
        %762 = vmatprep.subr.mxu0 0.0
        %763 = vmatpush1.msra.mxu0 0.0
        %764 = vmatprep.subr.mxu0 0.0
        %765 = vmatpush1.msra.mxu0 0.0
        %766 = vmatprep.subr.mxu0 0.0
        %767 = vmatpush1.msra.mxu0 0.0
        %768 = vmatprep.subr.mxu0 0.0
        %769 = vmatpush1.msra.mxu0 0.0
        %770 = vmatprep.subr.mxu0 0.0
        %771 = vmatpush1.msra.mxu0 0.0
        %772 = vmatprep.subr.mxu0 0.0
        %773 = vmatpush1.msra.mxu0 0.0
        %774 = vmatprep.subr.mxu0 0.0
        %775 = vmatpush1.msra.mxu0 0.0
        %776 = vmatprep.subr.mxu0 0.0
        %777 = vmatpush1.msra.mxu0 0.0
        %778 = vmatprep.subr.mxu0 0.0
        %779 = vmatpush1.msra.mxu0 0.0
        %780 = vmatprep.subr.mxu0 0.0
        %781 = vmatpush1.msra.mxu0 0.0
        %782 = vmatprep.subr.mxu0 0.0
        %783 = vmatpush1.msra.mxu0 0.0
        %784 = vmatprep.subr.mxu0 0.0
        %785 = vmatpush1.msra.mxu0 0.0
        %786 = vmatprep.subr.mxu0 0.0
        %787 = vmatpush1.msra.mxu0 0.0
        %788 = vmatprep.subr.mxu0 0.0
        %789 = vmatpush1.msra.mxu0 0.0
        %790 = vmatprep.subr.mxu0 0.0
        %791 = vmatpush1.msra.mxu0 0.0
        %792 = vmatprep.subr.mxu0 0.0
        %793 = vmatpush1.msra.mxu0 0.0
        %794 = vmatprep.subr.mxu0 0.0
        %795 = vmatpush1.msra.mxu0 0.0
        %796 = vmatprep.subr.mxu0 0.0
        %797 = vmatpush1.msra.mxu0 0.0
        %798 = vmatprep.subr.mxu0 0.0
        %799 = vmatpush1.msra.mxu0 0.0
        %800 = vmatprep.subr.mxu0 0.0
        %801 = vmatpush1.msra.mxu0 0.0
        %802 = vmatprep.subr.mxu0 0.0
        %803 = vmatpush1.msra.mxu0 0.0
        %804 = vmatprep.subr.mxu0 0.0
        %805 = vmatpush1.msra.mxu0 0.0
        %806 = vmatprep.subr.mxu0 0.0
        %807 = vmatpush1.msra.mxu0 0.0
        %808 = vmatprep.subr.mxu0 0.0
        %809 = vmatpush1.msra.mxu0 0.0
        %810 = vmatprep.subr.mxu0 0.0
        %811 = vmatpush1.msra.mxu0 0.0
        %812 = vmatprep.subr.mxu0 0.0
        %813 = vmatpush1.msra.mxu0 0.0
        %814 = vmatprep.subr.mxu0 0.0
        %815 = vmatpush1.msra.mxu0 0.0
        %816 = vmatprep.mubr.f32.mxu0 0.0
        %817 = vmatmul.mubr.f32.gmra.mrb[0].mxu0 %v747
        %v818 = vpop.f32.mrb[0].mxu0
        %v819 = vadd.f32 0.0, %v818
        %v820 = vpop.f32.mrb[0].mxu0
        %821 = vmatprep.mubr.f32.mxu0 0.0
        %822 = vmatmul.mubr.f32.gmra.mrb[0].mxu0 %v750
        %v823 = vpop.f32.mrb[0].mxu0
        %v824 = vadd.f32 0.0, %v823
        %v825 = vpop.f32.mrb[0].mxu0
        %826 = vdwg.mxu0
        %v827 = vadd.f32 %v731, %v819
        %v828 = vadd.f32 %v736, %v824
        %v829 = vld [vmem:[%s5] sm:$0x1]
        %v831 = vlaneseq
        %v832 = vshrl.u32 %v831, 7
        %v833 = vsub.s32 0, %v832
        %v834 = vrot.slane %v829, %v833
        %v836 = vmul.f32 %v827, %v834
        %v837 = vmul.f32 %v828, %v834
        %v838 = vld [vmem:[%s6] sm:$0x1]
        %v840 = vlaneseq
        %v841 = vshrl.u32 %v840, 7
        %v842 = vsub.s32 0, %v841
        %v843 = vrot.slane %v838, %v842
        %v845 = vadd.f32 %v836, %v843
        %v846 = vadd.f32 %v837, %v843
        %v847 = vmax.f32 %v845, 0.0
        %v848 = vmax.f32 %v846, 0.0
        %849 = vst [vmem:[#allocation3] sm:$0x1] 0.0
        %850 = vst [vmem:[#allocation3 + $0x11] sm:$0x1] 0.0
        %851 = vst [vmem:[#allocation3 + $0x1] sm:$0xff] %v847
        %852 = vst [vmem:[#allocation3 + $0x9] sm:$0xff] %v848
        %v853 = vld [vmem:[#allocation3] sm:$0xff]
        %v854 = vld [vmem:[#allocation3 + $0x8] sm:$0xff]
        %v855 = vld [vmem:[#allocation11] sm:$0xff]
        %v856 = vld [vmem:[#allocation11 + $0x8] sm:$0xff]
        %v857 = vld [vmem:[#allocation11 + $0x10] sm:$0xff]
        %v858 = vld [vmem:[#allocation11 + $0x18] sm:$0xff]
        %v859 = vld [vmem:[#allocation11 + $0x20] sm:$0xff]
        %v860 = vld [vmem:[#allocation11 + $0x28] sm:$0xff]
        %v861 = vld [vmem:[#allocation11 + $0x30] sm:$0xff]
        %v862 = vld [vmem:[#allocation11 + $0x38] sm:$0xff]
        %v863 = vld [vmem:[#allocation11 + $0x40] sm:$0xff]
        %v864 = vld [vmem:[#allocation11 + $0x48] sm:$0xff]
        %v865 = vld [vmem:[#allocation11 + $0x50] sm:$0xff]
        %v866 = vld [vmem:[#allocation11 + $0x58] sm:$0xff]
        %v867 = vld [vmem:[#allocation11 + $0x60] sm:$0xff]
        %v868 = vld [vmem:[#allocation11 + $0x68] sm:$0xff]
        %v869 = vld [vmem:[#allocation11 + $0x70] sm:$0xff]
        %v870 = vld [vmem:[#allocation11 + $0x78] sm:$0xff]
        %v871 = vld [vmem:[#allocation4] sm:$0xff]
        %v872 = vld [vmem:[#allocation4 + $0x8] sm:$0xff]
        %v873 = vld [vmem:[#allocation13] sm:$0xff]
        %v874 = vld [vmem:[#allocation13 + $0x8] sm:$0xff]
        %v875 = vld [vmem:[#allocation13 + $0x10] sm:$0xff]
        %v876 = vld [vmem:[#allocation13 + $0x18] sm:$0xff]
        %v877 = vld [vmem:[#allocation13 + $0x20] sm:$0xff]
        %v878 = vld [vmem:[#allocation13 + $0x28] sm:$0xff]
        %v879 = vld [vmem:[#allocation13 + $0x30] sm:$0xff]
        %v880 = vld [vmem:[#allocation13 + $0x38] sm:$0xff]
        %v881 = vld [vmem:[#allocation13 + $0x40] sm:$0xff]
        %v882 = vld [vmem:[#allocation13 + $0x48] sm:$0xff]
        %v883 = vld [vmem:[#allocation13 + $0x50] sm:$0xff]
        %v884 = vld [vmem:[#allocation13 + $0x58] sm:$0xff]
        %v886 = vsel %vm561, %v871, 0
        %v889 = vsel %vm561, %v872, 0
        %891 = vmatprep.subr.mxu0 0.0
        %892 = vmatpush1.msra.mxu0 %v873
        %893 = vmatprep.subr.mxu0 0.0
        %894 = vmatpush1.msra.mxu0 %v874
        %895 = vmatprep.subr.mxu0 0.0
        %896 = vmatpush1.msra.mxu0 %v875
        %897 = vmatprep.subr.mxu0 0.0
        %898 = vmatpush1.msra.mxu0 %v876
        %899 = vmatprep.subr.mxu0 0.0
        %900 = vmatpush1.msra.mxu0 %v877
        %901 = vmatprep.subr.mxu0 0.0
        %902 = vmatpush1.msra.mxu0 %v878
        %903 = vmatprep.subr.mxu0 0.0
        %904 = vmatpush1.msra.mxu0 %v879
        %905 = vmatprep.subr.mxu0 0.0
        %906 = vmatpush1.msra.mxu0 %v880
        %907 = vmatprep.subr.mxu0 0.0
        %908 = vmatpush1.msra.mxu0 %v881
        %909 = vmatprep.subr.mxu0 0.0
        %910 = vmatpush1.msra.mxu0 %v882
        %911 = vmatprep.subr.mxu0 0.0
        %912 = vmatpush1.msra.mxu0 %v883
        %913 = vmatprep.subr.mxu0 0.0
        %914 = vmatpush1.msra.mxu0 %v884
        %915 = vmatprep.subr.mxu0 0.0
        %916 = vmatpush1.msra.mxu0 0.0
        %917 = vmatprep.subr.mxu0 0.0
        %918 = vmatpush1.msra.mxu0 0.0
        %919 = vmatprep.subr.mxu0 0.0
        %920 = vmatpush1.msra.mxu0 0.0
        %921 = vmatprep.subr.mxu0 0.0
        %922 = vmatpush1.msra.mxu0 0.0
        %923 = vmatprep.subr.mxu0 0.0
        %924 = vmatpush1.msra.mxu0 0.0
        %925 = vmatprep.subr.mxu0 0.0
        %926 = vmatpush1.msra.mxu0 0.0
        %927 = vmatprep.subr.mxu0 0.0
        %928 = vmatpush1.msra.mxu0 0.0
        %929 = vmatprep.subr.mxu0 0.0
        %930 = vmatpush1.msra.mxu0 0.0
        %931 = vmatprep.subr.mxu0 0.0
        %932 = vmatpush1.msra.mxu0 0.0
        %933 = vmatprep.subr.mxu0 0.0
        %934 = vmatpush1.msra.mxu0 0.0
        %935 = vmatprep.subr.mxu0 0.0
        %936 = vmatpush1.msra.mxu0 0.0
        %937 = vmatprep.subr.mxu0 0.0
        %938 = vmatpush1.msra.mxu0 0.0
        %939 = vmatprep.subr.mxu0 0.0
        %940 = vmatpush1.msra.mxu0 0.0
        %941 = vmatprep.subr.mxu0 0.0
        %942 = vmatpush1.msra.mxu0 0.0
        %943 = vmatprep.subr.mxu0 0.0
        %944 = vmatpush1.msra.mxu0 0.0
        %945 = vmatprep.subr.mxu0 0.0
        %946 = vmatpush1.msra.mxu0 0.0
        %947 = vmatprep.subr.mxu0 0.0
        %948 = vmatpush1.msra.mxu0 0.0
        %949 = vmatprep.subr.mxu0 0.0
        %950 = vmatpush1.msra.mxu0 0.0
        %951 = vmatprep.subr.mxu0 0.0
        %952 = vmatpush1.msra.mxu0 0.0
        %953 = vmatprep.subr.mxu0 0.0
        %954 = vmatpush1.msra.mxu0 0.0
        %955 = vmatprep.mubr.f32.mxu0 0.0
        %956 = vmatmul.mubr.f32.gmra.mrb[0].mxu0 %v886
        %v957 = vpop.f32.mrb[0].mxu0
        %v958 = vadd.f32 0.0, %v957
        %v959 = vpop.f32.mrb[0].mxu0
        %960 = vmatprep.mubr.f32.mxu0 0.0
        %961 = vmatmul.mubr.f32.gmra.mrb[0].mxu0 %v889
        %v962 = vpop.f32.mrb[0].mxu0
        %v963 = vadd.f32 0.0, %v962
        %v964 = vpop.f32.mrb[0].mxu0
        %965 = vdwg.mxu0
        %966 = vmatprep.subr.mxu0 0.0
        %967 = vmatpush1.msra.mxu0 %v855
        %968 = vmatprep.subr.mxu0 0.0
        %969 = vmatpush1.msra.mxu0 %v856
        %970 = vmatprep.subr.mxu0 0.0
        %971 = vmatpush1.msra.mxu0 %v857
        %972 = vmatprep.subr.mxu0 0.0
        %973 = vmatpush1.msra.mxu0 %v858
        %974 = vmatprep.subr.mxu0 0.0
        %975 = vmatpush1.msra.mxu0 %v859
        %976 = vmatprep.subr.mxu0 0.0
        %977 = vmatpush1.msra.mxu0 %v860
        %978 = vmatprep.subr.mxu0 0.0
        %979 = vmatpush1.msra.mxu0 %v861
        %980 = vmatprep.subr.mxu0 0.0
        %981 = vmatpush1.msra.mxu0 %v862
        %982 = vmatprep.subr.mxu0 0.0
        %983 = vmatpush1.msra.mxu0 %v863
        %984 = vmatprep.subr.mxu0 0.0
        %985 = vmatpush1.msra.mxu0 %v864
        %986 = vmatprep.subr.mxu0 0.0
        %987 = vmatpush1.msra.mxu0 %v865
        %988 = vmatprep.subr.mxu0 0.0
        %989 = vmatpush1.msra.mxu0 %v866
        %990 = vmatprep.subr.mxu0 0.0
        %991 = vmatpush1.msra.mxu0 %v867
        %992 = vmatprep.subr.mxu0 0.0
        %993 = vmatpush1.msra.mxu0 %v868
        %994 = vmatprep.subr.mxu0 0.0
        %995 = vmatpush1.msra.mxu0 %v869
        %996 = vmatprep.subr.mxu0 0.0
        %997 = vmatpush1.msra.mxu0 %v870
        %998 = vmatprep.subr.mxu0 0.0
        %999 = vmatpush1.msra.mxu0 0.0
        %1000 = vmatprep.subr.mxu0 0.0
        %1001 = vmatpush1.msra.mxu0 0.0
        %1002 = vmatprep.subr.mxu0 0.0
        %1003 = vmatpush1.msra.mxu0 0.0
        %1004 = vmatprep.subr.mxu0 0.0
        %1005 = vmatpush1.msra.mxu0 0.0
        %1006 = vmatprep.subr.mxu0 0.0
        %1007 = vmatpush1.msra.mxu0 0.0
        %1008 = vmatprep.subr.mxu0 0.0
        %1009 = vmatpush1.msra.mxu0 0.0
        %1010 = vmatprep.subr.mxu0 0.0
        %1011 = vmatpush1.msra.mxu0 0.0
        %1012 = vmatprep.subr.mxu0 0.0
        %1013 = vmatpush1.msra.mxu0 0.0
        %1014 = vmatprep.subr.mxu0 0.0
        %1015 = vmatpush1.msra.mxu0 0.0
        %1016 = vmatprep.subr.mxu0 0.0
        %1017 = vmatpush1.msra.mxu0 0.0
        %1018 = vmatprep.subr.mxu0 0.0
        %1019 = vmatpush1.msra.mxu0 0.0
        %1020 = vmatprep.subr.mxu0 0.0
        %1021 = vmatpush1.msra.mxu0 0.0
        %1022 = vmatprep.subr.mxu0 0.0
        %1023 = vmatpush1.msra.mxu0 0.0
        %1024 = vmatprep.subr.mxu0 0.0
        %1025 = vmatpush1.msra.mxu0 0.0
        %1026 = vmatprep.subr.mxu0 0.0
        %1027 = vmatpush1.msra.mxu0 0.0
        %1028 = vmatprep.subr.mxu0 0.0
        %1029 = vmatpush1.msra.mxu0 0.0
        %1030 = vmatprep.mubr.f32.mxu0 0.0
        %1031 = vmatmul.mubr.f32.gmra.mrb[0].mxu0 %v853
        %v1032 = vpop.f32.mrb[0].mxu0
        %v1033 = vadd.f32 %v958, %v1032
        %v1034 = vpop.f32.mrb[0].mxu0
        %1035 = vmatprep.mubr.f32.mxu0 0.0
        %1036 = vmatmul.mubr.f32.gmra.mrb[0].mxu0 %v854
        %v1037 = vpop.f32.mrb[0].mxu0
        %v1038 = vadd.f32 %v963, %v1037
        %v1039 = vpop.f32.mrb[0].mxu0
        %1040 = vdwg.mxu0
        %v1041 = vld [vmem:[#allocation3 + $0x1] sm:$0xff]
        %v1042 = vld [vmem:[#allocation3 + $0x9] sm:$0xff]
        %s1043 = scalar_lea.vmem [#allocation11], 128
        %v1044 = vld [vmem:[%s1043] sm:$0xff]
        %v1045 = vld [vmem:[%s1043 + $0x8] sm:$0xff]
        %v1046 = vld [vmem:[%s1043 + $0x10] sm:$0xff]
        %v1047 = vld [vmem:[%s1043 + $0x18] sm:$0xff]
        %v1048 = vld [vmem:[%s1043 + $0x20] sm:$0xff]
        %v1049 = vld [vmem:[%s1043 + $0x28] sm:$0xff]
        %v1050 = vld [vmem:[%s1043 + $0x30] sm:$0xff]
        %v1051 = vld [vmem:[%s1043 + $0x38] sm:$0xff]
        %v1052 = vld [vmem:[%s1043 + $0x40] sm:$0xff]
        %v1053 = vld [vmem:[%s1043 + $0x48] sm:$0xff]
        %v1054 = vld [vmem:[%s1043 + $0x50] sm:$0xff]
        %v1055 = vld [vmem:[%s1043 + $0x58] sm:$0xff]
        %v1056 = vld [vmem:[%s1043 + $0x60] sm:$0xff]
        %v1057 = vld [vmem:[%s1043 + $0x68] sm:$0xff]
        %v1058 = vld [vmem:[%s1043 + $0x70] sm:$0xff]
        %v1059 = vld [vmem:[%s1043 + $0x78] sm:$0xff]
        %1060 = vmatprep.subr.mxu0 0.0
        %1061 = vmatpush1.msra.mxu0 %v1044
        %1062 = vmatprep.subr.mxu0 0.0
        %1063 = vmatpush1.msra.mxu0 %v1045
        %1064 = vmatprep.subr.mxu0 0.0
        %1065 = vmatpush1.msra.mxu0 %v1046
        %1066 = vmatprep.subr.mxu0 0.0
        %1067 = vmatpush1.msra.mxu0 %v1047
        %1068 = vmatprep.subr.mxu0 0.0
        %1069 = vmatpush1.msra.mxu0 %v1048
        %1070 = vmatprep.subr.mxu0 0.0
        %1071 = vmatpush1.msra.mxu0 %v1049
        %1072 = vmatprep.subr.mxu0 0.0
        %1073 = vmatpush1.msra.mxu0 %v1050
        %1074 = vmatprep.subr.mxu0 0.0
        %1075 = vmatpush1.msra.mxu0 %v1051
        %1076 = vmatprep.subr.mxu0 0.0
        %1077 = vmatpush1.msra.mxu0 %v1052
        %1078 = vmatprep.subr.mxu0 0.0
        %1079 = vmatpush1.msra.mxu0 %v1053
        %1080 = vmatprep.subr.mxu0 0.0
        %1081 = vmatpush1.msra.mxu0 %v1054
        %1082 = vmatprep.subr.mxu0 0.0
        %1083 = vmatpush1.msra.mxu0 %v1055
        %1084 = vmatprep.subr.mxu0 0.0
        %1085 = vmatpush1.msra.mxu0 %v1056
        %1086 = vmatprep.subr.mxu0 0.0
        %1087 = vmatpush1.msra.mxu0 %v1057
        %1088 = vmatprep.subr.mxu0 0.0
        %1089 = vmatpush1.msra.mxu0 %v1058
        %1090 = vmatprep.subr.mxu0 0.0
        %1091 = vmatpush1.msra.mxu0 %v1059
        %1092 = vmatprep.subr.mxu0 0.0
        %1093 = vmatpush1.msra.mxu0 0.0
        %1094 = vmatprep.subr.mxu0 0.0
        %1095 = vmatpush1.msra.mxu0 0.0
        %1096 = vmatprep.subr.mxu0 0.0
        %1097 = vmatpush1.msra.mxu0 0.0
        %1098 = vmatprep.subr.mxu0 0.0
        %1099 = vmatpush1.msra.mxu0 0.0
        %1100 = vmatprep.subr.mxu0 0.0
        %1101 = vmatpush1.msra.mxu0 0.0
        %1102 = vmatprep.subr.mxu0 0.0
        %1103 = vmatpush1.msra.mxu0 0.0
        %1104 = vmatprep.subr.mxu0 0.0
        %1105 = vmatpush1.msra.mxu0 0.0
        %1106 = vmatprep.subr.mxu0 0.0
        %1107 = vmatpush1.msra.mxu0 0.0
        %1108 = vmatprep.subr.mxu0 0.0
        %1109 = vmatpush1.msra.mxu0 0.0
        %1110 = vmatprep.subr.mxu0 0.0
        %1111 = vmatpush1.msra.mxu0 0.0
        %1112 = vmatprep.subr.mxu0 0.0
        %1113 = vmatpush1.msra.mxu0 0.0
        %1114 = vmatprep.subr.mxu0 0.0
        %1115 = vmatpush1.msra.mxu0 0.0
        %1116 = vmatprep.subr.mxu0 0.0
        %1117 = vmatpush1.msra.mxu0 0.0
        %1118 = vmatprep.subr.mxu0 0.0
        %1119 = vmatpush1.msra.mxu0 0.0
        %1120 = vmatprep.subr.mxu0 0.0
        %1121 = vmatpush1.msra.mxu0 0.0
        %1122 = vmatprep.subr.mxu0 0.0
        %1123 = vmatpush1.msra.mxu0 0.0
        %1124 = vmatprep.mubr.f32.mxu0 0.0
        %1125 = vmatmul.mubr.f32.gmra.mrb[0].mxu0 %v1041
        %v1126 = vpop.f32.mrb[0].mxu0
        %v1127 = vadd.f32 0.0, %v1126
        %v1128 = vpop.f32.mrb[0].mxu0
        %1129 = vmatprep.mubr.f32.mxu0 0.0
        %1130 = vmatmul.mubr.f32.gmra.mrb[0].mxu0 %v1042
        %v1131 = vpop.f32.mrb[0].mxu0
        %v1132 = vadd.f32 0.0, %v1131
        %v1133 = vpop.f32.mrb[0].mxu0
        %1134 = vdwg.mxu0
        %v1135 = vadd.f32 %v1033, %v1127
        %v1136 = vadd.f32 %v1038, %v1132
        %v1137 = vld [vmem:[#allocation4 + $0x1] sm:$0xff]
        %v1138 = vld [vmem:[#allocation4 + $0x9] sm:$0xff]
        %s1139 = scalar_lea.vmem [#allocation13], 96
        %v1140 = vld [vmem:[%s1139] sm:$0xff]
        %v1141 = vld [vmem:[%s1139 + $0x8] sm:$0xff]
        %v1142 = vld [vmem:[%s1139 + $0x10] sm:$0xff]
        %v1143 = vld [vmem:[%s1139 + $0x18] sm:$0xff]
        %v1144 = vld [vmem:[%s1139 + $0x20] sm:$0xff]
        %v1145 = vld [vmem:[%s1139 + $0x28] sm:$0xff]
        %v1146 = vld [vmem:[%s1139 + $0x30] sm:$0xff]
        %v1147 = vld [vmem:[%s1139 + $0x38] sm:$0xff]
        %v1148 = vld [vmem:[%s1139 + $0x40] sm:$0xff]
        %v1149 = vld [vmem:[%s1139 + $0x48] sm:$0xff]
        %v1150 = vld [vmem:[%s1139 + $0x50] sm:$0xff]
        %v1151 = vld [vmem:[%s1139 + $0x58] sm:$0xff]
        %v1153 = vsel %vm561, %v1137, 0
        %v1156 = vsel %vm561, %v1138, 0
        %1158 = vmatprep.subr.mxu0 0.0
        %1159 = vmatpush1.msra.mxu0 %v1140
        %1160 = vmatprep.subr.mxu0 0.0
        %1161 = vmatpush1.msra.mxu0 %v1141
        %1162 = vmatprep.subr.mxu0 0.0
        %1163 = vmatpush1.msra.mxu0 %v1142
        %1164 = vmatprep.subr.mxu0 0.0
        %1165 = vmatpush1.msra.mxu0 %v1143
        %1166 = vmatprep.subr.mxu0 0.0
        %1167 = vmatpush1.msra.mxu0 %v1144
        %1168 = vmatprep.subr.mxu0 0.0
        %1169 = vmatpush1.msra.mxu0 %v1145
        %1170 = vmatprep.subr.mxu0 0.0
        %1171 = vmatpush1.msra.mxu0 %v1146
        %1172 = vmatprep.subr.mxu0 0.0
        %1173 = vmatpush1.msra.mxu0 %v1147
        %1174 = vmatprep.subr.mxu0 0.0
        %1175 = vmatpush1.msra.mxu0 %v1148
        %1176 = vmatprep.subr.mxu0 0.0
        %1177 = vmatpush1.msra.mxu0 %v1149
        %1178 = vmatprep.subr.mxu0 0.0
        %1179 = vmatpush1.msra.mxu0 %v1150
        %1180 = vmatprep.subr.mxu0 0.0
        %1181 = vmatpush1.msra.mxu0 %v1151
        %1182 = vmatprep.subr.mxu0 0.0
        %1183 = vmatpush1.msra.mxu0 0.0
        %1184 = vmatprep.subr.mxu0 0.0
        %1185 = vmatpush1.msra.mxu0 0.0
        %1186 = vmatprep.subr.mxu0 0.0
        %1187 = vmatpush1.msra.mxu0 0.0
        %1188 = vmatprep.subr.mxu0 0.0
        %1189 = vmatpush1.msra.mxu0 0.0
        %1190 = vmatprep.subr.mxu0 0.0
        %1191 = vmatpush1.msra.mxu0 0.0
        %1192 = vmatprep.subr.mxu0 0.0
        %1193 = vmatpush1.msra.mxu0 0.0
        %1194 = vmatprep.subr.mxu0 0.0
        %1195 = vmatpush1.msra.mxu0 0.0
        %1196 = vmatprep.subr.mxu0 0.0
        %1197 = vmatpush1.msra.mxu0 0.0
        %1198 = vmatprep.subr.mxu0 0.0
        %1199 = vmatpush1.msra.mxu0 0.0
        %1200 = vmatprep.subr.mxu0 0.0
        %1201 = vmatpush1.msra.mxu0 0.0
        %1202 = vmatprep.subr.mxu0 0.0
        %1203 = vmatpush1.msra.mxu0 0.0
        %1204 = vmatprep.subr.mxu0 0.0
        %1205 = vmatpush1.msra.mxu0 0.0
        %1206 = vmatprep.subr.mxu0 0.0
        %1207 = vmatpush1.msra.mxu0 0.0
        %1208 = vmatprep.subr.mxu0 0.0
        %1209 = vmatpush1.msra.mxu0 0.0
        %1210 = vmatprep.subr.mxu0 0.0
        %1211 = vmatpush1.msra.mxu0 0.0
        %1212 = vmatprep.subr.mxu0 0.0
        %1213 = vmatpush1.msra.mxu0 0.0
        %1214 = vmatprep.subr.mxu0 0.0
        %1215 = vmatpush1.msra.mxu0 0.0
        %1216 = vmatprep.subr.mxu0 0.0
        %1217 = vmatpush1.msra.mxu0 0.0
        %1218 = vmatprep.subr.mxu0 0.0
        %1219 = vmatpush1.msra.mxu0 0.0
        %1220 = vmatprep.subr.mxu0 0.0
        %1221 = vmatpush1.msra.mxu0 0.0
        %1222 = vmatprep.mubr.f32.mxu0 0.0
        %1223 = vmatmul.mubr.f32.gmra.mrb[0].mxu0 %v1153
        %v1224 = vpop.f32.mrb[0].mxu0
        %v1225 = vadd.f32 0.0, %v1224
        %v1226 = vpop.f32.mrb[0].mxu0
        %1227 = vmatprep.mubr.f32.mxu0 0.0
        %1228 = vmatmul.mubr.f32.gmra.mrb[0].mxu0 %v1156
        %v1229 = vpop.f32.mrb[0].mxu0
        %v1230 = vadd.f32 0.0, %v1229
        %v1231 = vpop.f32.mrb[0].mxu0
        %1232 = vdwg.mxu0
        %v1233 = vadd.f32 %v1135, %v1225
        %v1234 = vadd.f32 %v1136, %v1230
        %v1235 = vld [vmem:[#allocation3 + $0x2] sm:$0xff]
        %v1236 = vld [vmem:[#allocation3 + $0xa] sm:$0xff]
        %s1237 = scalar_lea.vmem [#allocation11], 256
        %v1238 = vld [vmem:[%s1237] sm:$0xff]
        %v1239 = vld [vmem:[%s1237 + $0x8] sm:$0xff]
        %v1240 = vld [vmem:[%s1237 + $0x10] sm:$0xff]
        %v1241 = vld [vmem:[%s1237 + $0x18] sm:$0xff]
        %v1242 = vld [vmem:[%s1237 + $0x20] sm:$0xff]
        %v1243 = vld [vmem:[%s1237 + $0x28] sm:$0xff]
        %v1244 = vld [vmem:[%s1237 + $0x30] sm:$0xff]
        %v1245 = vld [vmem:[%s1237 + $0x38] sm:$0xff]
        %v1246 = vld [vmem:[%s1237 + $0x40] sm:$0xff]
        %v1247 = vld [vmem:[%s1237 + $0x48] sm:$0xff]
        %v1248 = vld [vmem:[%s1237 + $0x50] sm:$0xff]
        %v1249 = vld [vmem:[%s1237 + $0x58] sm:$0xff]
        %v1250 = vld [vmem:[%s1237 + $0x60] sm:$0xff]
        %v1251 = vld [vmem:[%s1237 + $0x68] sm:$0xff]
        %v1252 = vld [vmem:[%s1237 + $0x70] sm:$0xff]
        %v1253 = vld [vmem:[%s1237 + $0x78] sm:$0xff]
        %1254 = vmatprep.subr.mxu0 0.0
        %1255 = vmatpush1.msra.mxu0 %v1238
        %1256 = vmatprep.subr.mxu0 0.0
        %1257 = vmatpush1.msra.mxu0 %v1239
        %1258 = vmatprep.subr.mxu0 0.0
        %1259 = vmatpush1.msra.mxu0 %v1240
        %1260 = vmatprep.subr.mxu0 0.0
        %1261 = vmatpush1.msra.mxu0 %v1241
        %1262 = vmatprep.subr.mxu0 0.0
        %1263 = vmatpush1.msra.mxu0 %v1242
        %1264 = vmatprep.subr.mxu0 0.0
        %1265 = vmatpush1.msra.mxu0 %v1243
        %1266 = vmatprep.subr.mxu0 0.0
        %1267 = vmatpush1.msra.mxu0 %v1244
        %1268 = vmatprep.subr.mxu0 0.0
        %1269 = vmatpush1.msra.mxu0 %v1245
        %1270 = vmatprep.subr.mxu0 0.0
        %1271 = vmatpush1.msra.mxu0 %v1246
        %1272 = vmatprep.subr.mxu0 0.0
        %1273 = vmatpush1.msra.mxu0 %v1247
        %1274 = vmatprep.subr.mxu0 0.0
        %1275 = vmatpush1.msra.mxu0 %v1248
        %1276 = vmatprep.subr.mxu0 0.0
        %1277 = vmatpush1.msra.mxu0 %v1249
        %1278 = vmatprep.subr.mxu0 0.0
        %1279 = vmatpush1.msra.mxu0 %v1250
        %1280 = vmatprep.subr.mxu0 0.0
        %1281 = vmatpush1.msra.mxu0 %v1251
        %1282 = vmatprep.subr.mxu0 0.0
        %1283 = vmatpush1.msra.mxu0 %v1252
        %1284 = vmatprep.subr.mxu0 0.0
        %1285 = vmatpush1.msra.mxu0 %v1253
        %1286 = vmatprep.subr.mxu0 0.0
        %1287 = vmatpush1.msra.mxu0 0.0
        %1288 = vmatprep.subr.mxu0 0.0
        %1289 = vmatpush1.msra.mxu0 0.0
        %1290 = vmatprep.subr.mxu0 0.0
        %1291 = vmatpush1.msra.mxu0 0.0
        %1292 = vmatprep.subr.mxu0 0.0
        %1293 = vmatpush1.msra.mxu0 0.0
        %1294 = vmatprep.subr.mxu0 0.0
        %1295 = vmatpush1.msra.mxu0 0.0
        %1296 = vmatprep.subr.mxu0 0.0
        %1297 = vmatpush1.msra.mxu0 0.0
        %1298 = vmatprep.subr.mxu0 0.0
        %1299 = vmatpush1.msra.mxu0 0.0
        %1300 = vmatprep.subr.mxu0 0.0
        %1301 = vmatpush1.msra.mxu0 0.0
        %1302 = vmatprep.subr.mxu0 0.0
        %1303 = vmatpush1.msra.mxu0 0.0
        %1304 = vmatprep.subr.mxu0 0.0
        %1305 = vmatpush1.msra.mxu0 0.0
        %1306 = vmatprep.subr.mxu0 0.0
        %1307 = vmatpush1.msra.mxu0 0.0
        %1308 = vmatprep.subr.mxu0 0.0
        %1309 = vmatpush1.msra.mxu0 0.0
        %1310 = vmatprep.subr.mxu0 0.0
        %1311 = vmatpush1.msra.mxu0 0.0
        %1312 = vmatprep.subr.mxu0 0.0
        %1313 = vmatpush1.msra.mxu0 0.0
        %1314 = vmatprep.subr.mxu0 0.0
        %1315 = vmatpush1.msra.mxu0 0.0
        %1316 = vmatprep.subr.mxu0 0.0
        %1317 = vmatpush1.msra.mxu0 0.0
        %1318 = vmatprep.mubr.f32.mxu0 0.0
        %1319 = vmatmul.mubr.f32.gmra.mrb[0].mxu0 %v1235
        %v1320 = vpop.f32.mrb[0].mxu0
        %v1321 = vadd.f32 0.0, %v1320
        %v1322 = vpop.f32.mrb[0].mxu0
        %1323 = vmatprep.mubr.f32.mxu0 0.0
        %1324 = vmatmul.mubr.f32.gmra.mrb[0].mxu0 %v1236
        %v1325 = vpop.f32.mrb[0].mxu0
        %v1326 = vadd.f32 0.0, %v1325
        %v1327 = vpop.f32.mrb[0].mxu0
        %1328 = vdwg.mxu0
        %v1329 = vadd.f32 %v1233, %v1321
        %v1330 = vadd.f32 %v1234, %v1326
        %v1331 = vld [vmem:[#allocation4 + $0x2] sm:$0xff]
        %v1332 = vld [vmem:[#allocation4 + $0xa] sm:$0xff]
        %s1333 = scalar_lea.vmem [#allocation13], 192
        %v1334 = vld [vmem:[%s1333] sm:$0xff]
        %v1335 = vld [vmem:[%s1333 + $0x8] sm:$0xff]
        %v1336 = vld [vmem:[%s1333 + $0x10] sm:$0xff]
        %v1337 = vld [vmem:[%s1333 + $0x18] sm:$0xff]
        %v1338 = vld [vmem:[%s1333 + $0x20] sm:$0xff]
        %v1339 = vld [vmem:[%s1333 + $0x28] sm:$0xff]
        %v1340 = vld [vmem:[%s1333 + $0x30] sm:$0xff]
        %v1341 = vld [vmem:[%s1333 + $0x38] sm:$0xff]
        %v1342 = vld [vmem:[%s1333 + $0x40] sm:$0xff]
        %v1343 = vld [vmem:[%s1333 + $0x48] sm:$0xff]
        %v1344 = vld [vmem:[%s1333 + $0x50] sm:$0xff]
        %v1345 = vld [vmem:[%s1333 + $0x58] sm:$0xff]
        %v1347 = vsel %vm561, %v1331, 0
        %v1350 = vsel %vm561, %v1332, 0
        %1352 = vmatprep.subr.mxu0 0.0
        %1353 = vmatpush1.msra.mxu0 %v1334
        %1354 = vmatprep.subr.mxu0 0.0
        %1355 = vmatpush1.msra.mxu0 %v1335
        %1356 = vmatprep.subr.mxu0 0.0
        %1357 = vmatpush1.msra.mxu0 %v1336
        %1358 = vmatprep.subr.mxu0 0.0
        %1359 = vmatpush1.msra.mxu0 %v1337
        %1360 = vmatprep.subr.mxu0 0.0
        %1361 = vmatpush1.msra.mxu0 %v1338
        %1362 = vmatprep.subr.mxu0 0.0
        %1363 = vmatpush1.msra.mxu0 %v1339
        %1364 = vmatprep.subr.mxu0 0.0
        %1365 = vmatpush1.msra.mxu0 %v1340
        %1366 = vmatprep.subr.mxu0 0.0
        %1367 = vmatpush1.msra.mxu0 %v1341
        %1368 = vmatprep.subr.mxu0 0.0
        %1369 = vmatpush1.msra.mxu0 %v1342
        %1370 = vmatprep.subr.mxu0 0.0
        %1371 = vmatpush1.msra.mxu0 %v1343
        %1372 = vmatprep.subr.mxu0 0.0
        %1373 = vmatpush1.msra.mxu0 %v1344
        %1374 = vmatprep.subr.mxu0 0.0
        %1375 = vmatpush1.msra.mxu0 %v1345
        %1376 = vmatprep.subr.mxu0 0.0
        %1377 = vmatpush1.msra.mxu0 0.0
        %1378 = vmatprep.subr.mxu0 0.0
        %1379 = vmatpush1.msra.mxu0 0.0
        %1380 = vmatprep.subr.mxu0 0.0
        %1381 = vmatpush1.msra.mxu0 0.0
        %1382 = vmatprep.subr.mxu0 0.0
        %1383 = vmatpush1.msra.mxu0 0.0
        %1384 = vmatprep.subr.mxu0 0.0
        %1385 = vmatpush1.msra.mxu0 0.0
        %1386 = vmatprep.subr.mxu0 0.0
        %1387 = vmatpush1.msra.mxu0 0.0
        %1388 = vmatprep.subr.mxu0 0.0
        %1389 = vmatpush1.msra.mxu0 0.0
        %1390 = vmatprep.subr.mxu0 0.0
        %1391 = vmatpush1.msra.mxu0 0.0
        %1392 = vmatprep.subr.mxu0 0.0
        %1393 = vmatpush1.msra.mxu0 0.0
        %1394 = vmatprep.subr.mxu0 0.0
        %1395 = vmatpush1.msra.mxu0 0.0
        %1396 = vmatprep.subr.mxu0 0.0
        %1397 = vmatpush1.msra.mxu0 0.0
        %1398 = vmatprep.subr.mxu0 0.0
        %1399 = vmatpush1.msra.mxu0 0.0
        %1400 = vmatprep.subr.mxu0 0.0
        %1401 = vmatpush1.msra.mxu0 0.0
        %1402 = vmatprep.subr.mxu0 0.0
        %1403 = vmatpush1.msra.mxu0 0.0
        %1404 = vmatprep.subr.mxu0 0.0
        %1405 = vmatpush1.msra.mxu0 0.0
        %1406 = vmatprep.subr.mxu0 0.0
        %1407 = vmatpush1.msra.mxu0 0.0
        %1408 = vmatprep.subr.mxu0 0.0
        %1409 = vmatpush1.msra.mxu0 0.0
        %1410 = vmatprep.subr.mxu0 0.0
        %1411 = vmatpush1.msra.mxu0 0.0
        %1412 = vmatprep.subr.mxu0 0.0
        %1413 = vmatpush1.msra.mxu0 0.0
        %1414 = vmatprep.subr.mxu0 0.0
        %1415 = vmatpush1.msra.mxu0 0.0
        %1416 = vmatprep.mubr.f32.mxu0 0.0
        %1417 = vmatmul.mubr.f32.gmra.mrb[0].mxu0 %v1347
        %v1418 = vpop.f32.mrb[0].mxu0
        %v1419 = vadd.f32 0.0, %v1418
        %v1420 = vpop.f32.mrb[0].mxu0
        %1421 = vmatprep.mubr.f32.mxu0 0.0
        %1422 = vmatmul.mubr.f32.gmra.mrb[0].mxu0 %v1350
        %v1423 = vpop.f32.mrb[0].mxu0
        %v1424 = vadd.f32 0.0, %v1423
        %v1425 = vpop.f32.mrb[0].mxu0
        %1426 = vdwg.mxu0
        %v1427 = vadd.f32 %v1329, %v1419
        %v1428 = vadd.f32 %v1330, %v1424
        %v1429 = vld [vmem:[%s7] sm:$0x1]
        %v1431 = vlaneseq
        %v1432 = vshrl.u32 %v1431, 7
        %v1433 = vsub.s32 0, %v1432
        %v1434 = vrot.slane %v1429, %v1433
        %v1436 = vmul.f32 %v1427, %v1434
        %v1437 = vmul.f32 %v1428, %v1434
        %v1438 = vld [vmem:[%s8] sm:$0x1]
        %v1440 = vlaneseq
        %v1441 = vshrl.u32 %v1440, 7
        %v1442 = vsub.s32 0, %v1441
        %v1443 = vrot.slane %v1438, %v1442
        %v1445 = vadd.f32 %v1436, %v1443
        %v1446 = vadd.f32 %v1437, %v1443
        %v1447 = vmax.f32 %v1445, 0.0
        %v1448 = vmax.f32 %v1446, 0.0
        %1449 = vst [vmem:[%s430] sm:$0xff] %v1447
        %1450 = vst [vmem:[%s430 + $0x8] sm:$0xff] %v1448
        %s1451 = sand.u32 %s237, 1
        %s1452 = scalar_lea.sflag [#allocation7], %s1451
        %s1453 = sand.u32 %s237, 1
        %s1454 = smul.addr %s1453, 16
        %s1455 = scalar_lea.vmem [#allocation14], %s1454
        // Predicated region
        $region77: #{tpu_custom_call.1} parent=55 // pred_check
          %p1456 = pneg %p247
        $region78: #{tpu_custom_call.1} parent=55 // pred_check_branch
          %1458 = sbr.rel (%p1456) target = $region80
        $region79: #{tpu_custom_call.1} parent=55 // pred_region
          %s1460 = ssub.s32 256, 256
          %1461 = vsyncadd %s1452, %s1460
          %s1462 = smul.addr %s30, 2
          %s1463 = smul.addr %s1462, 128
          %s1464 = scalar_lea.hbm %s9, %s1463
          %s1465 = sshll.u32 %s1455, 4
          %s1466 = int_to_ptr.vmem [resolvable:$true] %s1465
          %1471 = dma.vmem_to_hbm [thread:$0]  %s1466, 256, %s1464, %s1452, 128, 128, 8
        $region80: #{tpu_custom_call.1} parent=55 // pred_fallthru
          _
      $region56: #{tpu_custom_call.1} parent=5 // pred_fallthru
        _
      %p1472 = scmp.le.s32.totalorder 2, %s25
      // Predicated region
      $region81: #{tpu_custom_call.1} parent=5 // pred_check
        %p1473 = pneg %p1472
      $region82: #{tpu_custom_call.1} parent=5 // pred_check_branch
        %1475 = sbr.rel (%p1473) target = $region84
      $region83: #{tpu_custom_call.1} parent=5 // pred_region
        %s1476 = ssub.s32 %s25, 2
        // Predicated region
        $region85: #{tpu_custom_call.1} parent=83 // pred_check
          %p1477 = pneg %p253
        $region86: #{tpu_custom_call.1} parent=83 // pred_check_branch
          %1479 = sbr.rel (%p1477) target = $region88
        $region87: #{tpu_custom_call.1} parent=83 // pred_region
          %s1480 = sand.u32 %s238, 1
          %s1481 = scalar_lea.sflag [#allocation7], %s1480
          %s1482 = sand.u32 %s238, 1
          %s1483 = smul.addr %s1482, 16
          %s1484 = scalar_lea.vmem [#allocation14], %s1483
          %1485 = dma.done %s1481, 256
        $region88: #{tpu_custom_call.1} parent=83 // pred_fallthru
          _
      $region84: #{tpu_custom_call.1} parent=5 // pred_fallthru
        _
    $region6: #{tpu_custom_call.1} parent=1 // loop_footer
      %s29 = sadd.s32 1, %s25
    $region7: #{tpu_custom_call.1} parent=1 // loop_footer_branch
      %24 = sbr.rel target = $region3
    $region8: #{tpu_custom_call.1} parent=1 // loop_exit
      _
    %1486 = vsyncpa [#allocation6], 1
    %s1487 = scalar_lea.sflag [#allocation6], 1
    %1488 = vsyncpa %s1487, 1
    %1489 = vsyncpa [#allocation9], 1
    %s1490 = scalar_lea.sflag [#allocation9], 1
    %1491 = vsyncpa %s1490, 1
    %1492 = vsyncpa [#allocation12], 1
    %1493 = vsyncpa [#allocation7], 1
    %s1494 = scalar_lea.sflag [#allocation7], 1
    %1495 = vsyncpa %s1494, 1

</llo_original>
